<compile_context>
chip_gen: v6e
topology: v6e:2x2x1
jax: 0.10.0
libtpu: 0.0.40
codegen_flags: <defaults>
</compile_context>

<pallas_src>
import functools

import numpy as np
import jax
import jax.numpy as jnp
from jax.experimental import pallas as pl
from jax.experimental.pallas import tpu as pltpu

# ----------------------------------------------------------------------------
# "cfg" constants (synthetic, deterministic — the reference reads them from a
# global config object).
# ----------------------------------------------------------------------------
NUM_NER_CLASSES = 22            # generate_seg_target implies labels in [0, 22)
NUM_SEG_CLASSES = 3
NUM_EFF_CLASSES = 3

CLASS_WEIGHTS = np.array([0.5] + [1.0 + 0.05 * i for i in range(NUM_NER_CLASSES - 1)],
                         dtype=np.float32)
SEG_CLASS_WEIGHTS = np.array([0.5, 1.0, 2.0], dtype=np.float32)
ALPHA_NER = 1.0
ALPHA_SEG = 0.5
ALPHA_EFF = 0.5

NUM_CORES = 2                   # leading "parallel" grid axis (v7x megacore)


def _round_up(x, m):
    return ((x + m - 1) // m) * m


# ----------------------------------------------------------------------------
# Pallas kernel: fused multi-head masked, class-weighted cross-entropy sums.
#
# refs = [tgt_ref, (logits_ref, w_ref) * H, out_ref]
#   tgt_ref    : (TM, 1)  int32  — shared targets for all heads
#   logits_ref : (TM, C_h) model dtype (true class dim, no lane padding)
#   w_ref      : (1, C_h) f32    — per-class weights
#   out_ref    : (1, 8, 128) f32 — per-core accumulator; head h uses lanes
#                2h (sum of w_t * nll) and 2h+1 (sum of w_t).
# ----------------------------------------------------------------------------
def _fused_ce_kernel(*refs, n, tile_rows, steps_per_core, gen_seg_flags):
    num_heads = len(gen_seg_flags)
    tgt_ref = refs[0]
    head_refs = refs[1:1 + 2 * num_heads]
    out_ref = refs[1 + 2 * num_heads]

    core = pl.program_id(0)
    step = pl.program_id(1)

    @pl.when(step == 0)
    def _():
        out_ref[...] = jnp.zeros_like(out_ref)

    # Row-tail mask: the last block (and any clamped duplicate block on the
    # second core) contains garbage rows; use where-select, never mask*value.
    base = (core * steps_per_core + step) * tile_rows
    t_raw = tgt_ref[...]                                            # (TM,1) i32
    row_ids = base + jax.lax.broadcasted_iota(jnp.int32, t_raw.shape, 0)
    row_valid = row_ids < n

    lane_idx = jax.lax.broadcasted_iota(jnp.int32, out_ref.shape, 2)
    contrib = jnp.zeros(out_ref.shape, jnp.float32)

    for h in range(num_heads):
        x = head_refs[2 * h][...].astype(jnp.float32)               # (TM, C)
        w = head_refs[2 * h + 1][...]                               # (1, C)

        t = t_raw
        if gen_seg_flags[h]:
            # Exact replica of NERSegmentationLoss.generate_seg_target
            seg = (((t >= 1) & (t < 8)).astype(jnp.int32)
                   + 2 * ((t >= 8) & (t < 15)).astype(jnp.int32)
                   + ((t >= 15) & (t < 22)).astype(jnp.int32))
            t = jnp.where(t <= 0, t, seg)

        # log-sum-exp over the true class dim (pad lanes are masked by layout)
        m = jnp.max(x, axis=-1, keepdims=True)                      # (TM, 1)
        lse = jnp.log(jnp.sum(jnp.exp(x - m), axis=-1, keepdims=True)) + m

        # one-hot gather of target logit and target class weight
        lanes = jax.lax.broadcasted_iota(jnp.int32, x.shape, 1)
        onehot = (lanes == t).astype(jnp.float32)
        x_t = jnp.sum(onehot * x, axis=-1, keepdims=True)           # (TM, 1)
        w_t = jnp.sum(onehot * w, axis=-1, keepdims=True)           # (TM, 1)

        valid = row_valid & (t >= 0)                                # torch mask
        loss_sum = jnp.sum(jnp.where(valid, w_t * (lse - x_t), 0.0))
        wsum = jnp.sum(jnp.where(valid, w_t, 0.0))

        contrib = contrib + jnp.where(lane_idx == 2 * h, loss_sum, 0.0)
        contrib = contrib + jnp.where(lane_idx == 2 * h + 1, wsum, 0.0)

    out_ref[...] += contrib


def multi_head_weighted_ce(targets, heads, *, tile_rows=1024, num_cores=NUM_CORES):
    """Fused masked weighted CE.

    targets : (N,) int array shared by all heads (negative == ignore).
    heads   : list of (logits_2d (N, C), class_weights (C,), gen_seg_target)
    Returns : list of scalar mean losses, one per head (torch CE semantics:
              sum(w[t]*nll) / sum(w[t]) over rows with target >= 0).
    """
    targets = targets.reshape(-1).astype(jnp.int32)
    n = targets.shape[0]
    tile_rows = _round_up(max(8, min(int(tile_rows), _round_up(n, 8))), 8)
    num_steps = pl.cdiv(n, tile_rows)
    spc = (num_steps + num_cores - 1) // num_cores        # steps per core

    # Clamp the block index so the second core's (possibly empty) extra step
    # never maps a fully out-of-bounds block; its rows are masked anyway.
    def row_map(c, s):
        return (jnp.minimum(c * spc + s, num_steps - 1), 0)

    gen_flags = tuple(bool(g) for (_, _, g) in heads)
    in_specs = [pl.BlockSpec((tile_rows, 1), row_map)]
    args = [targets.reshape(n, 1)]
    for logits, w, _ in heads:
        assert logits.shape[0] == n, "all heads must share the target row count"
        c = int(logits.shape[-1])
        args.append(logits)                               # true dtype, true C
        args.append(jnp.asarray(w, jnp.float32).reshape(1, c))
        in_specs.append(pl.BlockSpec((tile_rows, c), row_map))
        in_specs.append(pl.BlockSpec((1, c), lambda cc, ss: (0, 0)))

    kernel = functools.partial(
        _fused_ce_kernel, n=n, tile_rows=tile_rows, steps_per_core=spc,
        gen_seg_flags=gen_flags)

    out = pl.pallas_call(
        kernel,
        out_shape=jax.ShapeDtypeStruct((num_cores, 8, 128), jnp.float32),
        grid_spec=pltpu.PrefetchScalarGridSpec(
            num_scalar_prefetch=0,
            grid=(num_cores, spc),
            in_specs=in_specs,
            out_specs=pl.BlockSpec((1, 8, 128), lambda c, s: (c, 0, 0)),
        ),
        compiler_params=pltpu.CompilerParams(
            dimension_semantics=("parallel", "arbitrary")),
    )(*args)

    totals = out[:, 0, :].sum(axis=0)                     # (128,)
    # Matches torch: if every target is masked this divides by zero -> NaN.
    return [totals[2 * h] / totals[2 * h + 1] for h in range(len(heads))]


# ----------------------------------------------------------------------------
# Module-equivalent forward
# ----------------------------------------------------------------------------
def coef(k, num_iters):
    return max(0.0, float(np.cos(np.pi * k / (2.0 * num_iters))))


def ner_segmentation_loss(out_ner, out_seg, out_eff, target, eff_target,
                          *, num_iters, num_calls=0, tile_rows=1024):
    # TODO(synk): the stateful self.num_calls counter lives on the host; it is
    # passed explicitly here instead of being mutated inside the kernel.
    q = coef(num_calls, num_iters)
    ner_w = (1.0 - q) + q * jnp.asarray(CLASS_WEIGHTS)
    seg_w = (1.0 - q) + q * jnp.asarray(SEG_CLASS_WEIGHTS)
    eff_w = jnp.ones((out_eff.shape[-1],), jnp.float32)   # unweighted CE

    b, r_ner, l, c_ner = out_ner.shape
    r_eff = out_eff.shape[1]

    # torch.stack([target] * R, dim=1) -> replicate targets along the R dim
    tgt = jnp.broadcast_to(target[:, None, :], (b, r_ner, l)).reshape(-1)
    tgt_eff = jnp.broadcast_to(eff_target[:, None, :],
                               (b, r_eff, eff_target.shape[-1])).reshape(-1)

    # NER + SEG share the targets / row count -> one fused pallas_call.
    l_ner, l_seg = multi_head_weighted_ce(
        tgt,
        [(out_ner.reshape(-1, c_ner), ner_w, False),
         (out_seg.reshape(-1, out_seg.shape[-1]), seg_w, True)],
        tile_rows=tile_rows)
    (l_eff,) = multi_head_weighted_ce(
        tgt_eff,
        [(out_eff.reshape(-1, out_eff.shape[-1]), eff_w, False)],
        tile_rows=tile_rows)

    return ALPHA_NER * l_ner + ALPHA_SEG * l_seg + ALPHA_EFF * l_eff


# ----------------------------------------------------------------------------
# Pure-JAX reference (mirrors torch semantics) for a sanity check.
# ----------------------------------------------------------------------------
def _ref_wce(logits, tgt, w):
    valid = (tgt >= 0).astype(jnp.float32)
    tgt_c = jnp.where(tgt >= 0, tgt, 0)
    logp = jax.nn.log_softmax(logits.astype(jnp.float32), axis=-1)
    nll = -jnp.take_along_axis(logp, tgt_c[:, None], axis=-1)[:, 0]
    wt = w[tgt_c] * valid
    return jnp.sum(wt * nll) / jnp.sum(wt)


def _ref_gen_seg(t):
    seg = (((t >= 1) & (t < 8)).astype(jnp.int32)
           + 2 * ((t >= 8) & (t < 15)).astype(jnp.int32)
           + ((t >= 15) & (t < 22)).astype(jnp.int32))
    return jnp.where(t <= 0, t, seg)


def reference_loss(out_ner, out_seg, out_eff, target, eff_target,
                   *, num_iters, num_calls=0):
    q = coef(num_calls, num_iters)
    ner_w = (1.0 - q) + q * jnp.asarray(CLASS_WEIGHTS)
    seg_w = (1.0 - q) + q * jnp.asarray(SEG_CLASS_WEIGHTS)
    eff_w = jnp.ones((out_eff.shape[-1],), jnp.float32)
    b, r, l, c = out_ner.shape
    tgt = jnp.broadcast_to(target[:, None, :], (b, r, l)).reshape(-1)
    tgt_e = jnp.broadcast_to(eff_target[:, None, :],
                             (b, out_eff.shape[1], eff_target.shape[-1])).reshape(-1)
    l_ner = _ref_wce(out_ner.reshape(-1, c), tgt, ner_w)
    l_seg = _ref_wce(out_seg.reshape(-1, out_seg.shape[-1]), _ref_gen_seg(tgt), seg_w)
    l_eff = _ref_wce(out_eff.reshape(-1, out_eff.shape[-1]), tgt_e, eff_w)
    return ALPHA_NER * l_ner + ALPHA_SEG * l_seg + ALPHA_EFF * l_eff


if __name__ == "__main__":
    key = jax.random.PRNGKey(0)
    k1, k2, k3, k4, k5 = jax.random.split(key, 5)

    B, R, L = 2, 2, 16
    out_ner = jax.random.normal(k1, (B, R, L, NUM_NER_CLASSES), dtype=jnp.float32)
    out_seg = jax.random.normal(k2, (B, R, L, NUM_SEG_CLASSES), dtype=jnp.float32)
    out_eff = jax.random.normal(k3, (B, R, L, NUM_EFF_CLASSES), dtype=jnp.float32)
    # targets in [-1, 22): negative values are masked (target >= 0) like torch
    target = jax.random.randint(k4, (B, L), -1, NUM_NER_CLASSES, dtype=jnp.int32)
    eff_target = jax.random.randint(k5, (B, L), -1, NUM_EFF_CLASSES, dtype=jnp.int32)

    loss = ner_segmentation_loss(out_ner, out_seg, out_eff, target, eff_target,
                                 num_iters=10, num_calls=0)
    loss = jax.block_until_ready(loss)

    ref = jax.block_until_ready(
        reference_loss(out_ner, out_seg, out_eff, target, eff_target,
                       num_iters=10, num_calls=0))
    assert np.isfinite(float(loss))
    assert np.allclose(float(loss), float(ref), rtol=1e-4, atol=1e-4), (loss, ref)

    print("KERNEL_OK")
</pallas_src>

<mosaic_0001>
module attributes {stable_mosaic.version = 11 : i64} {
  func.func @_fused_ce_kernel(%arg0: i32, %arg1: i32, %arg2: memref<64x1xi32, #tpu.memory_space<vmem>>, %arg3: memref<64x22xf32, #tpu.memory_space<vmem>>, %arg4: memref<1x22xf32, #tpu.memory_space<vmem>>, %arg5: memref<64x3xf32, #tpu.memory_space<vmem>>, %arg6: memref<1x3xf32, #tpu.memory_space<vmem>>, %arg7: memref<1x8x128xf32, #tpu.memory_space<vmem>>) attributes {dimension_semantics = [#tpu.dimension_semantics<parallel>, #tpu.dimension_semantics<arbitrary>], iteration_bounds = array<i64: 2, 1>, scalar_prefetch = 0 : i64, scratch_operands = 0 : i64, tpu.core_type = #tpu.core_type<tc>, window_params = [{transform_indices = @transform_0, window_bounds = array<i64: 64, 1>}, {transform_indices = @transform_1, window_bounds = array<i64: 64, 22>}, {pipeline_mode = #tpu.pipeline_mode<synchronous>, transform_indices = @transform_2, window_bounds = array<i64: 1, 22>}, {transform_indices = @transform_3, window_bounds = array<i64: 64, 3>}, {pipeline_mode = #tpu.pipeline_mode<synchronous>, transform_indices = @transform_4, window_bounds = array<i64: 1, 3>}, {transform_indices = @transform_5, window_bounds = array<i64: 1, 8, 128>}]} {
    %c0_i32 = arith.constant 0 : i32
    %0 = arith.cmpi eq, %arg1, %c0_i32 : i32
    %1 = arith.extui %0 : i1 to i32
    %c0_i32_0 = arith.constant 0 : i32
    %2 = arith.cmpi ne, %1, %c0_i32_0 : i32
    scf.if %2 {
      %cst_46 = arith.constant 0.000000e+00 : f32
      %146 = vector.broadcast %cst_46 : f32 to vector<1x8x128xf32>
      %c0_47 = arith.constant 0 : index
      %c0_48 = arith.constant 0 : index
      %c0_49 = arith.constant 0 : index
      %147 = vector.load %arg7[%c0_47, %c0_48, %c0_49] : memref<1x8x128xf32, #tpu.memory_space<vmem>>, vector<1x8x128xf32>
      tpu.vector_store %arg7[%c0_47, %c0_48, %c0_49], %146 {strides = array<i32>} : memref<1x8x128xf32, #tpu.memory_space<vmem>>, vector<1x8x128xf32>,
    } else {
    }
    %c1_i32 = arith.constant 1 : i32
    %3 = arith.muli %arg0, %c1_i32 : i32
    %4 = arith.addi %3, %arg1 : i32
    %c64_i32 = arith.constant 64 : i32
    %5 = arith.muli %4, %c64_i32 : i32
    %c0 = arith.constant 0 : index
    %c0_1 = arith.constant 0 : index
    %6 = vector.load %arg2[%c0, %c0_1] : memref<64x1xi32, #tpu.memory_space<vmem>>, vector<64x1xi32>
    %7 = tpu.iota {dimensions = array<i32: 0>} : vector<64x1xi32>
    %8 = vector.broadcast %5 : i32 to vector<64x1xi32>
    %9 = arith.addi %8, %7 : vector<64x1xi32>
    %c64_i32_2 = arith.constant 64 : i32
    %10 = vector.broadcast %c64_i32_2 : i32 to vector<64x1xi32>
    %11 = arith.cmpi slt, %9, %10 : vector<64x1xi32>
    %12 = tpu.iota {dimensions = array<i32: 2>} : vector<1x8x128xi32>
    %cst = arith.constant 0.000000e+00 : f32
    %13 = vector.broadcast %cst : f32 to vector<1x8x128xf32>
    %c0_3 = arith.constant 0 : index
    %c0_4 = arith.constant 0 : index
    %14 = vector.load %arg3[%c0_3, %c0_4] : memref<64x22xf32, #tpu.memory_space<vmem>>, vector<64x22xf32>
    %c0_5 = arith.constant 0 : index
    %c0_6 = arith.constant 0 : index
    %15 = vector.load %arg4[%c0_5, %c0_6] : memref<1x22xf32, #tpu.memory_space<vmem>>, vector<1x22xf32>
    %cst_7 = arith.constant dense<0xFF800000> : vector<64xf32>
    %16 = vector.multi_reduction <maximumf>, %14, %cst_7 [1] : vector<64x22xf32> to vector<64xf32>
    %17 = vector.shape_cast %16 : vector<64xf32> to vector<64x1xf32>
    %18 = vector.broadcast %17 : vector<64x1xf32> to vector<64x22xf32>
    %19 = arith.subf %14, %18 : vector<64x22xf32>
    %20 = math.exp %19 : vector<64x22xf32>
    %cst_8 = arith.constant dense<0.000000e+00> : vector<64xf32>
    %21 = vector.multi_reduction <add>, %20, %cst_8 [1] : vector<64x22xf32> to vector<64xf32>
    %22 = vector.shape_cast %21 : vector<64xf32> to vector<64x1xf32>
    %23 = math.log %22 : vector<64x1xf32>
    %24 = arith.addf %23, %17 : vector<64x1xf32>
    %25 = tpu.iota {dimensions = array<i32: 1>} : vector<64x22xi32>
    %26 = vector.broadcast %6 : vector<64x1xi32> to vector<64x22xi32>
    %27 = arith.cmpi eq, %25, %26 : vector<64x22xi32>
    %28 = arith.extui %27 : vector<64x22xi1> to vector<64x22xi32>
    %29 = arith.sitofp %28 : vector<64x22xi32> to vector<64x22xf32>
    %30 = arith.mulf %29, %14 : vector<64x22xf32>
    %cst_9 = arith.constant dense<0.000000e+00> : vector<64xf32>
    %31 = vector.multi_reduction <add>, %30, %cst_9 [1] : vector<64x22xf32> to vector<64xf32>
    %32 = vector.shape_cast %31 : vector<64xf32> to vector<64x1xf32>
    %33 = vector.broadcast %15 : vector<1x22xf32> to vector<64x22xf32>
    %34 = arith.mulf %29, %33 : vector<64x22xf32>
    %cst_10 = arith.constant dense<0.000000e+00> : vector<64xf32>
    %35 = vector.multi_reduction <add>, %34, %cst_10 [1] : vector<64x22xf32> to vector<64xf32>
    %36 = vector.shape_cast %35 : vector<64xf32> to vector<64x1xf32>
    %c0_i32_11 = arith.constant 0 : i32
    %37 = vector.broadcast %c0_i32_11 : i32 to vector<64x1xi32>
    %38 = arith.cmpi sge, %6, %37 : vector<64x1xi32>
    %39 = arith.andi %11, %38 : vector<64x1xi1>
    %40 = arith.subf %24, %32 : vector<64x1xf32>
    %41 = arith.mulf %36, %40 : vector<64x1xf32>
    %cst_12 = arith.constant 0.000000e+00 : f32
    %42 = vector.broadcast %cst_12 : f32 to vector<64x1xf32>
    %43 = arith.select %39, %41, %42 : vector<64x1xi1>, vector<64x1xf32>
    %44 = vector.shape_cast %43 : vector<64x1xf32> to vector<1x64x1xf32>
    %cst_13 = arith.constant dense<0.000000e+00> : vector<1xf32>
    %45 = vector.multi_reduction <add>, %44, %cst_13 [1, 2] : vector<1x64x1xf32> to vector<1xf32>
    %46 = vector.shape_cast %45 : vector<1xf32> to vector<1x1x1xf32>
    %47 = vector.extract %46[0, 0, 0] : f32 from vector<1x1x1xf32>
    %cst_14 = arith.constant 0.000000e+00 : f32
    %48 = vector.broadcast %cst_14 : f32 to vector<64x1xf32>
    %49 = arith.select %39, %36, %48 : vector<64x1xi1>, vector<64x1xf32>
    %50 = vector.shape_cast %49 : vector<64x1xf32> to vector<1x64x1xf32>
    %cst_15 = arith.constant dense<0.000000e+00> : vector<1xf32>
    %51 = vector.multi_reduction <add>, %50, %cst_15 [1, 2] : vector<1x64x1xf32> to vector<1xf32>
    %52 = vector.shape_cast %51 : vector<1xf32> to vector<1x1x1xf32>
    %53 = vector.extract %52[0, 0, 0] : f32 from vector<1x1x1xf32>
    %c0_i32_16 = arith.constant 0 : i32
    %54 = vector.broadcast %c0_i32_16 : i32 to vector<1x8x128xi32>
    %55 = arith.cmpi eq, %12, %54 : vector<1x8x128xi32>
    %cst_17 = arith.constant 0.000000e+00 : f32
    %56 = vector.broadcast %47 : f32 to vector<1x8x128xf32>
    %57 = vector.broadcast %cst_17 : f32 to vector<1x8x128xf32>
    %58 = arith.select %55, %56, %57 : vector<1x8x128xi1>, vector<1x8x128xf32>
    %59 = arith.addf %13, %58 : vector<1x8x128xf32>
    %c1_i32_18 = arith.constant 1 : i32
    %60 = vector.broadcast %c1_i32_18 : i32 to vector<1x8x128xi32>
    %61 = arith.cmpi eq, %12, %60 : vector<1x8x128xi32>
    %cst_19 = arith.constant 0.000000e+00 : f32
    %62 = vector.broadcast %53 : f32 to vector<1x8x128xf32>
    %63 = vector.broadcast %cst_19 : f32 to vector<1x8x128xf32>
    %64 = arith.select %61, %62, %63 : vector<1x8x128xi1>, vector<1x8x128xf32>
    %65 = arith.addf %59, %64 : vector<1x8x128xf32>
    %c0_20 = arith.constant 0 : index
    %c0_21 = arith.constant 0 : index
    %66 = vector.load %arg5[%c0_20, %c0_21] : memref<64x3xf32, #tpu.memory_space<vmem>>, vector<64x3xf32>
    %c0_22 = arith.constant 0 : index
    %c0_23 = arith.constant 0 : index
    %67 = vector.load %arg6[%c0_22, %c0_23] : memref<1x3xf32, #tpu.memory_space<vmem>>, vector<1x3xf32>
    %c1_i32_24 = arith.constant 1 : i32
    %68 = vector.broadcast %c1_i32_24 : i32 to vector<64x1xi32>
    %69 = arith.cmpi sge, %6, %68 : vector<64x1xi32>
    %c8_i32 = arith.constant 8 : i32
    %70 = vector.broadcast %c8_i32 : i32 to vector<64x1xi32>
    %71 = arith.cmpi slt, %6, %70 : vector<64x1xi32>
    %72 = arith.andi %69, %71 : vector<64x1xi1>
    %73 = arith.extui %72 : vector<64x1xi1> to vector<64x1xi32>
    %c8_i32_25 = arith.constant 8 : i32
    %74 = vector.broadcast %c8_i32_25 : i32 to vector<64x1xi32>
    %75 = arith.cmpi sge, %6, %74 : vector<64x1xi32>
    %c15_i32 = arith.constant 15 : i32
    %76 = vector.broadcast %c15_i32 : i32 to vector<64x1xi32>
    %77 = arith.cmpi slt, %6, %76 : vector<64x1xi32>
    %78 = arith.andi %75, %77 : vector<64x1xi1>
    %79 = arith.extui %78 : vector<64x1xi1> to vector<64x1xi32>
    %c2_i32 = arith.constant 2 : i32
    %80 = vector.broadcast %c2_i32 : i32 to vector<64x1xi32>
    %81 = arith.muli %80, %79 : vector<64x1xi32>
    %82 = arith.addi %73, %81 : vector<64x1xi32>
    %c15_i32_26 = arith.constant 15 : i32
    %83 = vector.broadcast %c15_i32_26 : i32 to vector<64x1xi32>
    %84 = arith.cmpi sge, %6, %83 : vector<64x1xi32>
    %c22_i32 = arith.constant 22 : i32
    %85 = vector.broadcast %c22_i32 : i32 to vector<64x1xi32>
    %86 = arith.cmpi slt, %6, %85 : vector<64x1xi32>
    %87 = arith.andi %84, %86 : vector<64x1xi1>
    %88 = arith.extui %87 : vector<64x1xi1> to vector<64x1xi32>
    %89 = arith.addi %82, %88 : vector<64x1xi32>
    %c0_i32_27 = arith.constant 0 : i32
    %90 = vector.broadcast %c0_i32_27 : i32 to vector<64x1xi32>
    %91 = arith.cmpi sle, %6, %90 : vector<64x1xi32>
    %92 = arith.select %91, %6, %89 : vector<64x1xi1>, vector<64x1xi32>
    %cst_28 = arith.constant dense<0xFF800000> : vector<64xf32>
    %93 = vector.multi_reduction <maximumf>, %66, %cst_28 [1] : vector<64x3xf32> to vector<64xf32>
    %94 = vector.shape_cast %93 : vector<64xf32> to vector<64x1xf32>
    %95 = vector.broadcast %94 : vector<64x1xf32> to vector<64x3xf32>
    %96 = arith.subf %66, %95 : vector<64x3xf32>
    %97 = math.exp %96 : vector<64x3xf32>
    %cst_29 = arith.constant dense<0.000000e+00> : vector<64xf32>
    %98 = vector.multi_reduction <add>, %97, %cst_29 [1] : vector<64x3xf32> to vector<64xf32>
    %99 = vector.shape_cast %98 : vector<64xf32> to vector<64x1xf32>
    %100 = math.log %99 : vector<64x1xf32>
    %101 = arith.addf %100, %94 : vector<64x1xf32>
    %102 = tpu.iota {dimensions = array<i32: 1>} : vector<64x3xi32>
    %103 = vector.broadcast %92 : vector<64x1xi32> to vector<64x3xi32>
    %104 = arith.cmpi eq, %102, %103 : vector<64x3xi32>
    %105 = arith.extui %104 : vector<64x3xi1> to vector<64x3xi32>
    %106 = arith.sitofp %105 : vector<64x3xi32> to vector<64x3xf32>
    %107 = arith.mulf %106, %66 : vector<64x3xf32>
    %cst_30 = arith.constant dense<0.000000e+00> : vector<64xf32>
    %108 = vector.multi_reduction <add>, %107, %cst_30 [1] : vector<64x3xf32> to vector<64xf32>
    %109 = vector.shape_cast %108 : vector<64xf32> to vector<64x1xf32>
    %110 = vector.broadcast %67 : vector<1x3xf32> to vector<64x3xf32>
    %111 = arith.mulf %106, %110 : vector<64x3xf32>
    %cst_31 = arith.constant dense<0.000000e+00> : vector<64xf32>
    %112 = vector.multi_reduction <add>, %111, %cst_31 [1] : vector<64x3xf32> to vector<64xf32>
    %113 = vector.shape_cast %112 : vector<64xf32> to vector<64x1xf32>
    %c0_i32_32 = arith.constant 0 : i32
    %114 = vector.broadcast %c0_i32_32 : i32 to vector<64x1xi32>
    %115 = arith.cmpi sge, %92, %114 : vector<64x1xi32>
    %116 = arith.andi %11, %115 : vector<64x1xi1>
    %117 = arith.subf %101, %109 : vector<64x1xf32>
    %118 = arith.mulf %113, %117 : vector<64x1xf32>
    %cst_33 = arith.constant 0.000000e+00 : f32
    %119 = vector.broadcast %cst_33 : f32 to vector<64x1xf32>
    %120 = arith.select %116, %118, %119 : vector<64x1xi1>, vector<64x1xf32>
    %121 = vector.shape_cast %120 : vector<64x1xf32> to vector<1x64x1xf32>
    %cst_34 = arith.constant dense<0.000000e+00> : vector<1xf32>
    %122 = vector.multi_reduction <add>, %121, %cst_34 [1, 2] : vector<1x64x1xf32> to vector<1xf32>
    %123 = vector.shape_cast %122 : vector<1xf32> to vector<1x1x1xf32>
    %124 = vector.extract %123[0, 0, 0] : f32 from vector<1x1x1xf32>
    %cst_35 = arith.constant 0.000000e+00 : f32
    %125 = vector.broadcast %cst_35 : f32 to vector<64x1xf32>
    %126 = arith.select %116, %113, %125 : vector<64x1xi1>, vector<64x1xf32>
    %127 = vector.shape_cast %126 : vector<64x1xf32> to vector<1x64x1xf32>
    %cst_36 = arith.constant dense<0.000000e+00> : vector<1xf32>
    %128 = vector.multi_reduction <add>, %127, %cst_36 [1, 2] : vector<1x64x1xf32> to vector<1xf32>
    %129 = vector.shape_cast %128 : vector<1xf32> to vector<1x1x1xf32>
    %130 = vector.extract %129[0, 0, 0] : f32 from vector<1x1x1xf32>
    %c2_i32_37 = arith.constant 2 : i32
    %131 = vector.broadcast %c2_i32_37 : i32 to vector<1x8x128xi32>
    %132 = arith.cmpi eq, %12, %131 : vector<1x8x128xi32>
    %cst_38 = arith.constant 0.000000e+00 : f32
    %133 = vector.broadcast %124 : f32 to vector<1x8x128xf32>
    %134 = vector.broadcast %cst_38 : f32 to vector<1x8x128xf32>
    %135 = arith.select %132, %133, %134 : vector<1x8x128xi1>, vector<1x8x128xf32>
    %136 = arith.addf %65, %135 : vector<1x8x128xf32>
    %c3_i32 = arith.constant 3 : i32
    %137 = vector.broadcast %c3_i32 : i32 to vector<1x8x128xi32>
    %138 = arith.cmpi eq, %12, %137 : vector<1x8x128xi32>
    %cst_39 = arith.constant 0.000000e+00 : f32
    %139 = vector.broadcast %130 : f32 to vector<1x8x128xf32>
    %140 = vector.broadcast %cst_39 : f32 to vector<1x8x128xf32>
    %141 = arith.select %138, %139, %140 : vector<1x8x128xi1>, vector<1x8x128xf32>
    %142 = arith.addf %136, %141 : vector<1x8x128xf32>
    %c0_40 = arith.constant 0 : index
    %c0_41 = arith.constant 0 : index
    %c0_42 = arith.constant 0 : index
    %143 = vector.load %arg7[%c0_40, %c0_41, %c0_42] : memref<1x8x128xf32, #tpu.memory_space<vmem>>, vector<1x8x128xf32>
    %144 = arith.addf %143, %142 : vector<1x8x128xf32>
    %c0_43 = arith.constant 0 : index
    %c0_44 = arith.constant 0 : index
    %c0_45 = arith.constant 0 : index
    %145 = vector.load %arg7[%c0_43, %c0_44, %c0_45] : memref<1x8x128xf32, #tpu.memory_space<vmem>>, vector<1x8x128xf32>
    tpu.vector_store %arg7[%c0_43, %c0_44, %c0_45], %144 {strides = array<i32>} : memref<1x8x128xf32, #tpu.memory_space<vmem>>, vector<1x8x128xf32>,
    return
  }
  func.func @transform_0(%arg0: i32, %arg1: i32) -> (i32, i32) {
    %c1_i32 = arith.constant 1 : i32
    %0 = arith.muli %arg0, %c1_i32 : i32
    %1 = arith.addi %0, %arg1 : i32
    %c0_i32 = arith.constant 0 : i32
    %2 = arith.minsi %1, %c0_i32 : i32
    %c0_i32_0 = arith.constant 0 : i32
    %c0_i32_1 = arith.constant 0 : i32
    return %2, %c0_i32_0 : i32, i32
  }
  func.func @transform_1(%arg0: i32, %arg1: i32) -> (i32, i32) {
    %c1_i32 = arith.constant 1 : i32
    %0 = arith.muli %arg0, %c1_i32 : i32
    %1 = arith.addi %0, %arg1 : i32
    %c0_i32 = arith.constant 0 : i32
    %2 = arith.minsi %1, %c0_i32 : i32
    %c0_i32_0 = arith.constant 0 : i32
    %c0_i32_1 = arith.constant 0 : i32
    return %2, %c0_i32_0 : i32, i32
  }
  func.func @transform_2(%arg0: i32, %arg1: i32) -> (i32, i32) {
    %c0_i32 = arith.constant 0 : i32
    %c0_i32_0 = arith.constant 0 : i32
    %c0_i32_1 = arith.constant 0 : i32
    return %c0_i32, %c0_i32_0 : i32, i32
  }
  func.func @transform_3(%arg0: i32, %arg1: i32) -> (i32, i32) {
    %c1_i32 = arith.constant 1 : i32
    %0 = arith.muli %arg0, %c1_i32 : i32
    %1 = arith.addi %0, %arg1 : i32
    %c0_i32 = arith.constant 0 : i32
    %2 = arith.minsi %1, %c0_i32 : i32
    %c0_i32_0 = arith.constant 0 : i32
    %c0_i32_1 = arith.constant 0 : i32
    return %2, %c0_i32_0 : i32, i32
  }
  func.func @transform_4(%arg0: i32, %arg1: i32) -> (i32, i32) {
    %c0_i32 = arith.constant 0 : i32
    %c0_i32_0 = arith.constant 0 : i32
    %c0_i32_1 = arith.constant 0 : i32
    return %c0_i32, %c0_i32_0 : i32, i32
  }
  func.func @transform_5(%arg0: i32, %arg1: i32) -> (i32, i32, i32) {
    %c0_i32 = arith.constant 0 : i32
    %c0_i32_0 = arith.constant 0 : i32
    %c0_i32_1 = arith.constant 0 : i32
    return %arg0, %c0_i32, %c0_i32_0 : i32, i32, i32
  }
}

</mosaic_0001>

<llo_original>
// kernel: tpu_custom_call.1
$region0: #{tpu_custom_call.1}
  #allocation0 [shape = 'u32[]', space=smem, size = 0x4, offset = 0x4, fixed_abs, tag = 'smem constant byte address 0x4 - core index']
  #allocation1 [shape = 'u32[144,128]{1,0:T(1,128)}', space=vmem, size = 0x12000, scoped, tag = 'internal scratch']
  %s0 = inlined_call_operand.vmem [shape: s32[64,1], index: 0, kind: input, shape index: {}]
  %s1 = inlined_call_operand.vmem [shape: f32[64,22], index: 1, kind: input, shape index: {}]
  %s2 = inlined_call_operand.vmem [shape: f32[1,22], index: 2, kind: input, shape index: {}]
  %s3 = inlined_call_operand.vmem [shape: f32[64,3], index: 3, kind: input, shape index: {}]
  %s4 = inlined_call_operand.vmem [shape: f32[1,3], index: 4, kind: input, shape index: {}]
  %s5 = inlined_call_operand.hbm [shape: f32[2,8,128], index: 5, kind: output, shape index: {}]
  %s6 = sld [smem:[#allocation0]]
  $region57: #{tpu_custom_call.1} parent=0
    _
  %s8 = ssub.s32 1, %s6
  %s9 = scalar_select 0, %s8, %s6
  $region1: #{tpu_custom_call.1} parent=0
    #allocation2 [shape = 'u8[8192]{0}', space=vmem, size = 0x2000, scoped, tag = 'output window, operand 0']
    #allocation3 [shape = 's32[2]{0}', space=sflag, size = 0x8, scoped, tag = 'scoped memory for tpu_custom_call.1']
    %10 = vsyncpa [#allocation3], 0
    %s11 = scalar_lea.sflag [#allocation3], 1
    %12 = vsyncpa %s11, 0
    loop: start=0, step=1, limit=4
    $region2: #{tpu_custom_call.1} parent=1 // loop_pre_header
      _
    $region3: #{tpu_custom_call.1} parent=1 // loop_header
      %s14 = sphi 0, %s18
      %p15 = scmp.ge.s32.totalorder %s14, 4
      %s21 = sphi 0, %s33
      %s22 = sphi 0, %s29
      %s23 = sphi 0, %s21
      %s24 = sphi 0, %s22
      %s25 = sphi 0, %s23
      %s26 = sphi 0, %s24
      %s42 = sphi 0, %s44
      %s45 = sphi 0, %s42
      %s46 = sphi 0, %s45
      %s62 = sphi 0, %s46
      %s74 = sphi 0, %s76
      %s77 = sphi 0, %s74
      %s78 = sphi 0, %s77
      %s94 = sphi 0, %s78
      %s98 = sphi 0, %s98
      %s100 = sphi 0, %s98
      %s101 = sphi 0, %s100
      %s115 = sphi 0, %s101
      %s127 = sphi 0, %s129
      %s130 = sphi 0, %s127
      %s131 = sphi 0, %s130
      %s147 = sphi 0, %s131
      %s151 = sphi 0, %s151
      %s153 = sphi 0, %s151
      %s154 = sphi 0, %s153
      %s168 = sphi 0, %s154
      %s174 = sphi 0, %s176
      %s177 = sphi 0, %s174
      %s178 = sphi 0, %s177
      %s194 = sphi 0, %s178
    $region4: #{tpu_custom_call.1} parent=1 // loop_header_branch
      %17 = sbr.rel (%p15) target = $region8
    $region5: #{tpu_custom_call.1} parent=1 // loop_body
      %s19 = ssub.s32 %s14, 1
      %s20 = ssub.s32 %s14, 2
      %s27 = sadd.s32 1, %s22
      %p28 = scmp.ge.s32.totalorder %s27, 1
      %s29 = scalar_select %p28, 0, %s27
      %s30 = sadd.s32 1, %s21
      %s31 = scalar_select %p28, %s30, %s21
      %p32 = scmp.ge.s32.totalorder %s31, 2
      %s33 = scalar_select %p32, 0, %s31
      %s34 = sadd.s32 %s21, %s22
      %p35 = scmp.lt.s32.totalorder %s34, 0
      %s36 = scalar_select %p35, %s34, 0
      %s37 = sadd.s32 %s33, %s29
      %p38 = scmp.lt.s32.totalorder %s37, 0
      %s39 = scalar_select %p38, %s37, 0
      %s40 = ssub.s32 %s36, %s39
      %p41 = scmp.eq.s32.totalorder %s40, 0
      %s43 = sadd.s32 %s42, 1
      %s44 = scalar_select %p41, %s42, %s43
      %p47 = pneg %p41
      %p48 = scmp.eq.s32.totalorder %s14, 1
      %p49 = por %p47, %p48
      %p50 = scmp.ne.s32.totalorder %s42, %s45
      %p51 = scmp.eq.s32.totalorder %s14, 0
      %p52 = por %p50, %p51
      %p53 = scmp.ne.s32.totalorder %s42, %s45
      %p54 = scmp.eq.s32.totalorder %s19, 1
      %p55 = por %p53, %p54
      %p56 = scmp.ne.s32.totalorder %s45, %s46
      %p57 = scmp.eq.s32.totalorder %s19, 0
      %p58 = por %p56, %p57
      %p59 = scmp.ne.s32.totalorder %s45, %s46
      %p60 = scmp.eq.s32.totalorder %s20, 1
      %p61 = por %p59, %p60
      %p63 = scmp.ne.s32.totalorder %s46, %s62
      %p64 = scmp.eq.s32.totalorder %s20, 0
      %p65 = por %p63, %p64
      %s66 = sadd.s32 %s21, %s22
      %p67 = scmp.lt.s32.totalorder %s66, 0
      %s68 = scalar_select %p67, %s66, 0
      %s69 = sadd.s32 %s33, %s29
      %p70 = scmp.lt.s32.totalorder %s69, 0
      %s71 = scalar_select %p70, %s69, 0
      %s72 = ssub.s32 %s68, %s71
      %p73 = scmp.eq.s32.totalorder %s72, 0
      %s75 = sadd.s32 %s74, 1
      %s76 = scalar_select %p73, %s74, %s75
      %p79 = pneg %p73
      %p80 = scmp.eq.s32.totalorder %s14, 1
      %p81 = por %p79, %p80
      %p82 = scmp.ne.s32.totalorder %s74, %s77
      %p83 = scmp.eq.s32.totalorder %s14, 0
      %p84 = por %p82, %p83
      %p85 = scmp.ne.s32.totalorder %s74, %s77
      %p86 = scmp.eq.s32.totalorder %s19, 1
      %p87 = por %p85, %p86
      %p88 = scmp.ne.s32.totalorder %s77, %s78
      %p89 = scmp.eq.s32.totalorder %s19, 0
      %p90 = por %p88, %p89
      %p91 = scmp.ne.s32.totalorder %s77, %s78
      %p92 = scmp.eq.s32.totalorder %s20, 1
      %p93 = por %p91, %p92
      %p95 = scmp.ne.s32.totalorder %s78, %s94
      %p96 = scmp.eq.s32.totalorder %s20, 0
      %p97 = por %p95, %p96
      %s99 = sadd.s32 %s98, 1
      %p102 = scmp.eq.s32.totalorder %s14, 1
      %p103 = scmp.ne.s32.totalorder %s98, %s100
      %p104 = scmp.eq.s32.totalorder %s14, 0
      %p105 = por %p103, %p104
      %p106 = scmp.ne.s32.totalorder %s98, %s100
      %p107 = scmp.eq.s32.totalorder %s19, 1
      %p108 = por %p106, %p107
      %p109 = scmp.ne.s32.totalorder %s100, %s101
      %p110 = scmp.eq.s32.totalorder %s19, 0
      %p111 = por %p109, %p110
      %p112 = scmp.ne.s32.totalorder %s100, %s101
      %p113 = scmp.eq.s32.totalorder %s20, 1
      %p114 = por %p112, %p113
      %p116 = scmp.ne.s32.totalorder %s101, %s115
      %p117 = scmp.eq.s32.totalorder %s20, 0
      %p118 = por %p116, %p117
      %s119 = sadd.s32 %s21, %s22
      %p120 = scmp.lt.s32.totalorder %s119, 0
      %s121 = scalar_select %p120, %s119, 0
      %s122 = sadd.s32 %s33, %s29
      %p123 = scmp.lt.s32.totalorder %s122, 0
      %s124 = scalar_select %p123, %s122, 0
      %s125 = ssub.s32 %s121, %s124
      %p126 = scmp.eq.s32.totalorder %s125, 0
      %s128 = sadd.s32 %s127, 1
      %s129 = scalar_select %p126, %s127, %s128
      %p132 = pneg %p126
      %p133 = scmp.eq.s32.totalorder %s14, 1
      %p134 = por %p132, %p133
      %p135 = scmp.ne.s32.totalorder %s127, %s130
      %p136 = scmp.eq.s32.totalorder %s14, 0
      %p137 = por %p135, %p136
      %p138 = scmp.ne.s32.totalorder %s127, %s130
      %p139 = scmp.eq.s32.totalorder %s19, 1
      %p140 = por %p138, %p139
      %p141 = scmp.ne.s32.totalorder %s130, %s131
      %p142 = scmp.eq.s32.totalorder %s19, 0
      %p143 = por %p141, %p142
      %p144 = scmp.ne.s32.totalorder %s130, %s131
      %p145 = scmp.eq.s32.totalorder %s20, 1
      %p146 = por %p144, %p145
      %p148 = scmp.ne.s32.totalorder %s131, %s147
      %p149 = scmp.eq.s32.totalorder %s20, 0
      %p150 = por %p148, %p149
      %s152 = sadd.s32 %s151, 1
      %p155 = scmp.eq.s32.totalorder %s14, 1
      %p156 = scmp.ne.s32.totalorder %s151, %s153
      %p157 = scmp.eq.s32.totalorder %s14, 0
      %p158 = por %p156, %p157
      %p159 = scmp.ne.s32.totalorder %s151, %s153
      %p160 = scmp.eq.s32.totalorder %s19, 1
      %p161 = por %p159, %p160
      %p162 = scmp.ne.s32.totalorder %s153, %s154
      %p163 = scmp.eq.s32.totalorder %s19, 0
      %p164 = por %p162, %p163
      %p165 = scmp.ne.s32.totalorder %s153, %s154
      %p166 = scmp.eq.s32.totalorder %s20, 1
      %p167 = por %p165, %p166
      %p169 = scmp.ne.s32.totalorder %s154, %s168
      %p170 = scmp.eq.s32.totalorder %s20, 0
      %p171 = por %p169, %p170
      %s172 = ssub.s32 %s21, %s33
      %p173 = scmp.eq.s32.totalorder %s172, 0
      %s175 = sadd.s32 %s174, 1
      %s176 = scalar_select %p173, %s174, %s175
      %p179 = pneg %p173
      %p180 = scmp.eq.s32.totalorder %s14, 1
      %p181 = por %p179, %p180
      %p182 = scmp.ne.s32.totalorder %s174, %s177
      %p183 = scmp.eq.s32.totalorder %s14, 0
      %p184 = por %p182, %p183
      %p185 = scmp.ne.s32.totalorder %s174, %s177
      %p186 = scmp.eq.s32.totalorder %s19, 1
      %p187 = por %p185, %p186
      %p188 = scmp.ne.s32.totalorder %s177, %s178
      %p189 = scmp.eq.s32.totalorder %s19, 0
      %p190 = por %p188, %p189
      %p191 = scmp.ne.s32.totalorder %s177, %s178
      %p192 = scmp.eq.s32.totalorder %s20, 1
      %p193 = por %p191, %p192
      %p195 = scmp.ne.s32.totalorder %s178, %s194
      %p196 = scmp.eq.s32.totalorder %s20, 0
      %p197 = por %p195, %p196
      %p198 = scmp.le.s32.totalorder 1, %s14
      %p199 = scmp.lt.s32.totalorder %s14, 3
      %p200 = pnand %p198, %p199
      %p201 = pneg %p200
      // Predicated region
      $region9: #{tpu_custom_call.1} parent=5 // pred_check
        _
      $region10: #{tpu_custom_call.1} parent=5 // pred_check_branch
        %203 = sbr.rel (%p200) target = $region12
      $region11: #{tpu_custom_call.1} parent=5 // pred_region
        %s204 = ssub.s32 %s14, 1
        // Predicated region
        $region13: #{tpu_custom_call.1} parent=11 // pred_check
          %p205 = pneg %p111
        $region14: #{tpu_custom_call.1} parent=11 // pred_check_branch
          %207 = sbr.rel (%p205) target = $region16
        $region15: #{tpu_custom_call.1} parent=11 // pred_region
          _
        $region16: #{tpu_custom_call.1} parent=11 // pred_fallthru
          _
        // Predicated region
        $region17: #{tpu_custom_call.1} parent=11 // pred_check
          %p208 = pneg %p164
        $region18: #{tpu_custom_call.1} parent=11 // pred_check_branch
          %210 = sbr.rel (%p208) target = $region20
        $region19: #{tpu_custom_call.1} parent=11 // pred_region
          _
        $region20: #{tpu_custom_call.1} parent=11 // pred_fallthru
          _
      $region12: #{tpu_custom_call.1} parent=5 // pred_fallthru
        _
      %p211 = scmp.lt.s32.totalorder %s14, 2
      // Predicated region
      $region21: #{tpu_custom_call.1} parent=5 // pred_check
        %p212 = pneg %p211
      $region22: #{tpu_custom_call.1} parent=5 // pred_check_branch
        %214 = sbr.rel (%p212) target = $region24
      $region23: #{tpu_custom_call.1} parent=5 // pred_region
        // Predicated region
        $region25: #{tpu_custom_call.1} parent=23 // pred_check
          %p215 = pneg %p52
        $region26: #{tpu_custom_call.1} parent=23 // pred_check_branch
          %217 = sbr.rel (%p215) target = $region28
        $region27: #{tpu_custom_call.1} parent=23 // pred_region
          %s218 = sadd.s32 %s21, %s22
          %p219 = scmp.lt.s32.totalorder %s218, 0
          %s220 = scalar_select %p219, %s218, 0
          %s221 = smul.u32 8, %s220
          %p222 = scmp.lt.s32.totalorder %s221, 7
          %s223 = scalar_select %p222, %s221, 7
          %s224 = smul.addr %s223, 8
          %s225 = scalar_lea.vmem %s0, %s224
          %s226 = sadd.s32 %s21, %s22
          %p227 = scmp.lt.s32.totalorder %s226, 0
          %s228 = scalar_select %p227, %s226, 0
          %s229 = smul.u32 8, %s228
        $region28: #{tpu_custom_call.1} parent=23 // pred_fallthru
          _
        // Predicated region
        $region29: #{tpu_custom_call.1} parent=23 // pred_check
          %p230 = pneg %p84
        $region30: #{tpu_custom_call.1} parent=23 // pred_check_branch
          %232 = sbr.rel (%p230) target = $region32
        $region31: #{tpu_custom_call.1} parent=23 // pred_region
          %s233 = sadd.s32 %s21, %s22
          %p234 = scmp.lt.s32.totalorder %s233, 0
          %s235 = scalar_select %p234, %s233, 0
          %s236 = smul.u32 8, %s235
          %p237 = scmp.lt.s32.totalorder %s236, 7
          %s238 = scalar_select %p237, %s236, 7
          %s239 = smul.addr %s238, 8
          %s240 = scalar_lea.vmem %s1, %s239
          %s241 = sadd.s32 %s21, %s22
          %p242 = scmp.lt.s32.totalorder %s241, 0
          %s243 = scalar_select %p242, %s241, 0
          %s244 = smul.u32 8, %s243
        $region32: #{tpu_custom_call.1} parent=23 // pred_fallthru
          _
        // Predicated region
        $region33: #{tpu_custom_call.1} parent=23 // pred_check
          %p245 = pneg %p137
        $region34: #{tpu_custom_call.1} parent=23 // pred_check_branch
          %247 = sbr.rel (%p245) target = $region36
        $region35: #{tpu_custom_call.1} parent=23 // pred_region
          %s248 = sadd.s32 %s21, %s22
          %p249 = scmp.lt.s32.totalorder %s248, 0
          %s250 = scalar_select %p249, %s248, 0
          %s251 = smul.u32 8, %s250
          %p252 = scmp.lt.s32.totalorder %s251, 7
          %s253 = scalar_select %p252, %s251, 7
          %s254 = smul.addr %s253, 8
          %s255 = scalar_lea.vmem %s3, %s254
          %s256 = sadd.s32 %s21, %s22
          %p257 = scmp.lt.s32.totalorder %s256, 0
          %s258 = scalar_select %p257, %s256, 0
          %s259 = smul.u32 8, %s258
        $region36: #{tpu_custom_call.1} parent=23 // pred_fallthru
          _
      $region24: #{tpu_custom_call.1} parent=5 // pred_fallthru
        _
      %p260 = scmp.le.s32.totalorder 1, %s14
      %p261 = scmp.lt.s32.totalorder %s14, 3
      %p262 = pnand %p260, %p261
      %p263 = pneg %p262
      // Predicated region
      $region37: #{tpu_custom_call.1} parent=5 // pred_check
        _
      $region38: #{tpu_custom_call.1} parent=5 // pred_check_branch
        %265 = sbr.rel (%p262) target = $region40
      $region39: #{tpu_custom_call.1} parent=5 // pred_region
        %s266 = ssub.s32 %s14, 1
        %s267 = sadd.s32 %s23, %s24
        %p268 = scmp.lt.s32.totalorder %s267, 0
        %s269 = scalar_select %p268, %s267, 0
        %s270 = smul.u32 8, %s269
        %p271 = scmp.lt.s32.totalorder %s270, 7
        %s272 = scalar_select %p271, %s270, 7
        %s273 = smul.addr %s272, 8
        %s274 = scalar_lea.vmem %s0, %s273
        %p275 = pneg %p58
        %p276 = pneg %p55
        %s277 = sadd.s32 %s23, %s24
        %p278 = scmp.lt.s32.totalorder %s277, 0
        %s279 = scalar_select %p278, %s277, 0
        %s280 = smul.u32 8, %s279
        %p281 = scmp.lt.s32.totalorder %s280, 7
        %s282 = scalar_select %p281, %s280, 7
        %s283 = smul.addr %s282, 8
        %s284 = scalar_lea.vmem %s1, %s283
        %p285 = pneg %p90
        %p286 = pneg %p87
        %p287 = pneg %p111
        %p288 = pneg %p108
        %s289 = sadd.s32 %s23, %s24
        %p290 = scmp.lt.s32.totalorder %s289, 0
        %s291 = scalar_select %p290, %s289, 0
        %s292 = smul.u32 8, %s291
        %p293 = scmp.lt.s32.totalorder %s292, 7
        %s294 = scalar_select %p293, %s292, 7
        %s295 = smul.addr %s294, 8
        %s296 = scalar_lea.vmem %s3, %s295
        %p297 = pneg %p143
        %p298 = pneg %p140
        %p299 = pneg %p164
        %p300 = pneg %p161
        %p301 = pneg %p190
        %p302 = pneg %p187
        %s303 = sand.u32 %s177, 1
        %s304 = scalar_lea.sflag [#allocation3], %s303
        %s305 = sand.u32 %s177, 1
        %s306 = smul.addr %s305, 8
        %s307 = scalar_lea.vmem [#allocation2], %s306
        %s308 = sadd.s32 %s23, %s24
        %p309 = scmp.lt.s32.totalorder %s308, 0
        %s310 = scalar_select %p309, %s308, 0
        %s311 = smul.u32 8, %s310
        %p312 = scmp.lt.s32.totalorder %s311, 7
        %s313 = scalar_select %p312, %s311, 7
        %s314 = smul.addr %s313, 8
        %s315 = scalar_lea.vmem %s0, %s314
        %s316 = sadd.s32 %s23, %s24
        %p317 = scmp.lt.s32.totalorder %s316, 0
        %s318 = scalar_select %p317, %s316, 0
        %s319 = smul.u32 8, %s318
        %s320 = sadd.s32 %s23, %s24
        %p321 = scmp.lt.s32.totalorder %s320, 0
        %s322 = scalar_select %p321, %s320, 0
        %s323 = smul.u32 8, %s322
        %p324 = scmp.lt.s32.totalorder %s323, 7
        %s325 = scalar_select %p324, %s323, 7
        %s326 = smul.addr %s325, 8
        %s327 = scalar_lea.vmem %s1, %s326
        %s328 = sadd.s32 %s23, %s24
        %p329 = scmp.lt.s32.totalorder %s328, 0
        %s330 = scalar_select %p329, %s328, 0
        %s331 = smul.u32 8, %s330
        %s332 = sadd.s32 %s23, %s24
        %p333 = scmp.lt.s32.totalorder %s332, 0
        %s334 = scalar_select %p333, %s332, 0
        %s335 = smul.u32 8, %s334
        %p336 = scmp.lt.s32.totalorder %s335, 7
        %s337 = scalar_select %p336, %s335, 7
        %s338 = smul.addr %s337, 8
        %s339 = scalar_lea.vmem %s3, %s338
        %s340 = sadd.s32 %s23, %s24
        %p341 = scmp.lt.s32.totalorder %s340, 0
        %s342 = scalar_select %p341, %s340, 0
        %s343 = smul.u32 8, %s342
        %p344 = scmp.eq.s32.totalorder %s24, 0
        // Predicated region
        $region41: #{tpu_custom_call.1} parent=39 // pred_check
          %p345 = pneg %p344
        $region42: #{tpu_custom_call.1} parent=39 // pred_check_branch
          %347 = sbr.rel (%p345) target = $region44
        $region43: #{tpu_custom_call.1} parent=39 // pred_region
          %348 = vst [vmem:[%s307] sm:$0xff] 0.0
        $region44: #{tpu_custom_call.1} parent=39 // pred_fallthru
          _
        %s349 = sadd.s32 %s23, %s24
        %s350 = smul.u32 %s349, 64
        %v351 = vld [vmem:[%s315] sm:$0xff]
        %v352 = vld [vmem:[%s315 + $0x8] sm:$0xff]
        %v353 = vld [vmem:[%s315 + $0x10] sm:$0xff]
        %v354 = vld [vmem:[%s315 + $0x18] sm:$0xff]
        %v355 = vld [vmem:[%s315 + $0x20] sm:$0xff]
        %v356 = vld [vmem:[%s315 + $0x28] sm:$0xff]
        %v357 = vld [vmem:[%s315 + $0x30] sm:$0xff]
        %v358 = vld [vmem:[%s315 + $0x38] sm:$0xff]
        %v359 = vlaneseq
        %v360 = vshrl.u32 %v359, 7
        %v361 = vadd.s32 %v360, 8
        %v362 = vadd.s32 %v360, 16
        %v363 = vadd.s32 %v360, 24
        %v364 = vadd.s32 %v360, 32
        %v365 = vadd.s32 %v360, 40
        %v366 = vadd.s32 %v360, 48
        %v367 = vadd.s32 %v360, 56
        %v368 = vstv %s350
        %v369 = vadd.s32 %v368, %v360
        %v370 = vadd.s32 %v368, %v361
        %v371 = vadd.s32 %v368, %v362
        %v372 = vadd.s32 %v368, %v363
        %v373 = vadd.s32 %v368, %v364
        %v374 = vadd.s32 %v368, %v365
        %v375 = vadd.s32 %v368, %v366
        %v376 = vadd.s32 %v368, %v367
        %vm377 = vcmp.lt.s32.totalorder %v369, 64
        %vm378 = vcmp.lt.s32.totalorder %v370, 64
        %vm379 = vcmp.lt.s32.totalorder %v371, 64
        %vm380 = vcmp.lt.s32.totalorder %v372, 64
        %vm381 = vcmp.lt.s32.totalorder %v373, 64
        %vm382 = vcmp.lt.s32.totalorder %v374, 64
        %vm383 = vcmp.lt.s32.totalorder %v375, 64
        %vm384 = vcmp.lt.s32.totalorder %v376, 64
        %v385 = vlaneseq
        %v386 = vand.u32 %v385, 127
        %v387 = vld [vmem:[%s327] sm:$0xff]
        %v388 = vld [vmem:[%s327 + $0x8] sm:$0xff]
        %v389 = vld [vmem:[%s327 + $0x10] sm:$0xff]
        %v390 = vld [vmem:[%s327 + $0x18] sm:$0xff]
        %v391 = vld [vmem:[%s327 + $0x20] sm:$0xff]
        %v392 = vld [vmem:[%s327 + $0x28] sm:$0xff]
        %v393 = vld [vmem:[%s327 + $0x30] sm:$0xff]
        %v394 = vld [vmem:[%s327 + $0x38] sm:$0xff]
        %v395 = vld [vmem:[%s2] sm:$0x1]
        %vm396 = vcmask 179200
        %v397 = vsel %vm396, %v387, -inf
        %398 = vmax.xlane.f32.xlu0 %v397
        %v399 = vpop.xlane.xlu0 %398
        %v400 = vsel %vm396, %v388, -inf
        %401 = vmax.xlane.f32.xlu0 %v400
        %v402 = vpop.xlane.xlu0 %401
        %v403 = vsel %vm396, %v389, -inf
        %404 = vmax.xlane.f32.xlu0 %v403
        %v405 = vpop.xlane.xlu0 %404
        %v406 = vsel %vm396, %v390, -inf
        %407 = vmax.xlane.f32.xlu0 %v406
        %v408 = vpop.xlane.xlu0 %407
        %v409 = vsel %vm396, %v391, -inf
        %410 = vmax.xlane.f32.xlu0 %v409
        %v411 = vpop.xlane.xlu0 %410
        %v412 = vsel %vm396, %v392, -inf
        %413 = vmax.xlane.f32.xlu0 %v412
        %v414 = vpop.xlane.xlu0 %413
        %v415 = vsel %vm396, %v393, -inf
        %416 = vmax.xlane.f32.xlu0 %v415
        %v417 = vpop.xlane.xlu0 %416
        %v418 = vsel %vm396, %v394, -inf
        %419 = vmax.xlane.f32.xlu0 %v418
        %v420 = vpop.xlane.xlu0 %419
        %v421 = vsub.f32 %v387, %v399
        %v422 = vsub.f32 %v388, %v402
        %v423 = vsub.f32 %v389, %v405
        %v424 = vsub.f32 %v390, %v408
        %v425 = vsub.f32 %v391, %v411
        %v426 = vsub.f32 %v392, %v414
        %v427 = vsub.f32 %v393, %v417
        %v428 = vsub.f32 %v394, %v420
        %v429 = vmul.f32 %v421, 1.442695
        %v430 = vpow.pop %v429
        %v431 = vmul.f32 %v422, 1.442695
        %v432 = vpow.pop %v431
        %v433 = vmul.f32 %v423, 1.442695
        %v434 = vpow.pop %v433
        %v435 = vmul.f32 %v424, 1.442695
        %v436 = vpow.pop %v435
        %v437 = vmul.f32 %v425, 1.442695
        %v438 = vpow.pop %v437
        %v439 = vmul.f32 %v426, 1.442695
        %v440 = vpow.pop %v439
        %v441 = vmul.f32 %v427, 1.442695
        %v442 = vpow.pop %v441
        %v443 = vmul.f32 %v428, 1.442695
        %v444 = vpow.pop %v443
        %v445 = vsel %vm396, %v430, 0.0
        %446 = vadd.xlane.f32.xlu0 %v445
        %v447 = vpop.xlane.xlu0 %446
        %v448 = vsel %vm396, %v432, 0.0
        %449 = vadd.xlane.f32.xlu0 %v448
        %v450 = vpop.xlane.xlu0 %449
        %v451 = vsel %vm396, %v434, 0.0
        %452 = vadd.xlane.f32.xlu0 %v451
        %v453 = vpop.xlane.xlu0 %452
        %v454 = vsel %vm396, %v436, 0.0
        %455 = vadd.xlane.f32.xlu0 %v454
        %v456 = vpop.xlane.xlu0 %455
        %v457 = vsel %vm396, %v438, 0.0
        %458 = vadd.xlane.f32.xlu0 %v457
        %v459 = vpop.xlane.xlu0 %458
        %v460 = vsel %vm396, %v440, 0.0
        %461 = vadd.xlane.f32.xlu0 %v460
        %v462 = vpop.xlane.xlu0 %461
        %v463 = vsel %vm396, %v442, 0.0
        %464 = vadd.xlane.f32.xlu0 %v463
        %v465 = vpop.xlane.xlu0 %464
        %v466 = vsel %vm396, %v444, 0.0
        %467 = vadd.xlane.f32.xlu0 %v466
        %v468 = vpop.xlane.xlu0 %467
        %v469 = vlog2.pop %v447
        %v470 = vmul.f32 %v469, 0.6931472
        %v471 = vlog2.pop %v450
        %v472 = vmul.f32 %v471, 0.6931472
        %v473 = vlog2.pop %v453
        %v474 = vmul.f32 %v473, 0.6931472
        %v475 = vlog2.pop %v456
        %v476 = vmul.f32 %v475, 0.6931472
        %v477 = vlog2.pop %v459
        %v478 = vmul.f32 %v477, 0.6931472
        %v479 = vlog2.pop %v462
        %v480 = vmul.f32 %v479, 0.6931472
        %v481 = vlog2.pop %v465
        %v482 = vmul.f32 %v481, 0.6931472
        %v483 = vlog2.pop %v468
        %v484 = vmul.f32 %v483, 0.6931472
        %v485 = vadd.f32 %v470, %v399
        %v486 = vadd.f32 %v472, %v402
        %v487 = vadd.f32 %v474, %v405
        %v488 = vadd.f32 %v476, %v408
        %v489 = vadd.f32 %v478, %v411
        %v490 = vadd.f32 %v480, %v414
        %v491 = vadd.f32 %v482, %v417
        %v492 = vadd.f32 %v484, %v420
        %493 = vset.pattern.permute.xlu0 0
        %494 = vperm.xlu0 %493, %v351
        %v495 = vpop.permute.xlu0 %494
        %496 = vset.pattern.permute.xlu0 0
        %497 = vperm.xlu0 %496, %v352
        %v498 = vpop.permute.xlu0 %497
        %499 = vset.pattern.permute.xlu0 0
        %500 = vperm.xlu0 %499, %v353
        %v501 = vpop.permute.xlu0 %500
        %502 = vset.pattern.permute.xlu0 0
        %503 = vperm.xlu0 %502, %v354
        %v504 = vpop.permute.xlu0 %503
        %505 = vset.pattern.permute.xlu0 0
        %506 = vperm.xlu0 %505, %v355
        %v507 = vpop.permute.xlu0 %506
        %508 = vset.pattern.permute.xlu0 0
        %509 = vperm.xlu0 %508, %v356
        %v510 = vpop.permute.xlu0 %509
        %511 = vset.pattern.permute.xlu0 0
        %512 = vperm.xlu0 %511, %v357
        %v513 = vpop.permute.xlu0 %512
        %514 = vset.pattern.permute.xlu0 0
        %515 = vperm.xlu0 %514, %v358
        %v516 = vpop.permute.xlu0 %515
        %vm517 = vcmp.eq.s32.totalorder %v386, %v495
        %vm518 = vcmp.eq.s32.totalorder %v386, %v498
        %vm519 = vcmp.eq.s32.totalorder %v386, %v501
        %vm520 = vcmp.eq.s32.totalorder %v386, %v504
        %vm521 = vcmp.eq.s32.totalorder %v386, %v507
        %vm522 = vcmp.eq.s32.totalorder %v386, %v510
        %vm523 = vcmp.eq.s32.totalorder %v386, %v513
        %vm524 = vcmp.eq.s32.totalorder %v386, %v516
        %v525 = vsel %vm517, 1, 0
        %v526 = vsel %vm518, 1, 0
        %v527 = vsel %vm519, 1, 0
        %v528 = vsel %vm520, 1, 0
        %v529 = vsel %vm521, 1, 0
        %v530 = vsel %vm522, 1, 0
        %v531 = vsel %vm523, 1, 0
        %v532 = vsel %vm524, 1, 0
        %v533 = vcvt.s32.f32 %v525
        %v534 = vcvt.s32.f32 %v526
        %v535 = vcvt.s32.f32 %v527
        %v536 = vcvt.s32.f32 %v528
        %v537 = vcvt.s32.f32 %v529
        %v538 = vcvt.s32.f32 %v530
        %v539 = vcvt.s32.f32 %v531
        %v540 = vcvt.s32.f32 %v532
        %v541 = vmul.f32 %v533, %v387
        %v542 = vmul.f32 %v534, %v388
        %v543 = vmul.f32 %v535, %v389
        %v544 = vmul.f32 %v536, %v390
        %v545 = vmul.f32 %v537, %v391
        %v546 = vmul.f32 %v538, %v392
        %v547 = vmul.f32 %v539, %v393
        %v548 = vmul.f32 %v540, %v394
        %v549 = vsel %vm396, %v541, 0.0
        %550 = vadd.xlane.f32.xlu0 %v549
        %v551 = vpop.xlane.xlu0 %550
        %v552 = vsel %vm396, %v542, 0.0
        %553 = vadd.xlane.f32.xlu0 %v552
        %v554 = vpop.xlane.xlu0 %553
        %v555 = vsel %vm396, %v543, 0.0
        %556 = vadd.xlane.f32.xlu0 %v555
        %v557 = vpop.xlane.xlu0 %556
        %v558 = vsel %vm396, %v544, 0.0
        %559 = vadd.xlane.f32.xlu0 %v558
        %v560 = vpop.xlane.xlu0 %559
        %v561 = vsel %vm396, %v545, 0.0
        %562 = vadd.xlane.f32.xlu0 %v561
        %v563 = vpop.xlane.xlu0 %562
        %v564 = vsel %vm396, %v546, 0.0
        %565 = vadd.xlane.f32.xlu0 %v564
        %v566 = vpop.xlane.xlu0 %565
        %v567 = vsel %vm396, %v547, 0.0
        %568 = vadd.xlane.f32.xlu0 %v567
        %v569 = vpop.xlane.xlu0 %568
        %v570 = vsel %vm396, %v548, 0.0
        %571 = vadd.xlane.f32.xlu0 %v570
        %v572 = vpop.xlane.xlu0 %571
        %v574 = vlaneseq
        %v575 = vshrl.u32 %v574, 7
        %v576 = vsub.s32 0, %v575
        %v577 = vrot.slane %v395, %v576
        %v579 = vmul.f32 %v533, %v577
        %v580 = vmul.f32 %v534, %v577
        %v581 = vmul.f32 %v535, %v577
        %v582 = vmul.f32 %v536, %v577
        %v583 = vmul.f32 %v537, %v577
        %v584 = vmul.f32 %v538, %v577
        %v585 = vmul.f32 %v539, %v577
        %v586 = vmul.f32 %v540, %v577
        %v587 = vsel %vm396, %v579, 0.0
        %588 = vadd.xlane.f32.xlu0 %v587
        %v589 = vpop.xlane.xlu0 %588
        %v590 = vsel %vm396, %v580, 0.0
        %591 = vadd.xlane.f32.xlu0 %v590
        %v592 = vpop.xlane.xlu0 %591
        %v593 = vsel %vm396, %v581, 0.0
        %594 = vadd.xlane.f32.xlu0 %v593
        %v595 = vpop.xlane.xlu0 %594
        %v596 = vsel %vm396, %v582, 0.0
        %597 = vadd.xlane.f32.xlu0 %v596
        %v598 = vpop.xlane.xlu0 %597
        %v599 = vsel %vm396, %v583, 0.0
        %600 = vadd.xlane.f32.xlu0 %v599
        %v601 = vpop.xlane.xlu0 %600
        %v602 = vsel %vm396, %v584, 0.0
        %603 = vadd.xlane.f32.xlu0 %v602
        %v604 = vpop.xlane.xlu0 %603
        %v605 = vsel %vm396, %v585, 0.0
        %606 = vadd.xlane.f32.xlu0 %v605
        %v607 = vpop.xlane.xlu0 %606
        %v608 = vsel %vm396, %v586, 0.0
        %609 = vadd.xlane.f32.xlu0 %v608
        %v610 = vpop.xlane.xlu0 %609
        %vm611 = vcmp.ge.s32.totalorder %v351, 0
        %vm612 = vcmp.ge.s32.totalorder %v352, 0
        %vm613 = vcmp.ge.s32.totalorder %v353, 0
        %vm614 = vcmp.ge.s32.totalorder %v354, 0
        %vm615 = vcmp.ge.s32.totalorder %v355, 0
        %vm616 = vcmp.ge.s32.totalorder %v356, 0
        %vm617 = vcmp.ge.s32.totalorder %v357, 0
        %vm618 = vcmp.ge.s32.totalorder %v358, 0
        %vm619 = vmand %vm377, %vm611
        %vm620 = vmand %vm378, %vm612
        %vm621 = vmand %vm379, %vm613
        %vm622 = vmand %vm380, %vm614
        %vm623 = vmand %vm381, %vm615
        %vm624 = vmand %vm382, %vm616
        %vm625 = vmand %vm383, %vm617
        %vm626 = vmand %vm384, %vm618
        %v627 = vsub.f32 %v485, %v551
        %v628 = vsub.f32 %v486, %v554
        %v629 = vsub.f32 %v487, %v557
        %v630 = vsub.f32 %v488, %v560
        %v631 = vsub.f32 %v489, %v563
        %v632 = vsub.f32 %v490, %v566
        %v633 = vsub.f32 %v491, %v569
        %v634 = vsub.f32 %v492, %v572
        %v635 = vmul.f32 %v589, %v627
        %v636 = vmul.f32 %v592, %v628
        %v637 = vmul.f32 %v595, %v629
        %v638 = vmul.f32 %v598, %v630
        %v639 = vmul.f32 %v601, %v631
        %v640 = vmul.f32 %v604, %v632
        %v641 = vmul.f32 %v607, %v633
        %v642 = vmul.f32 %v610, %v634
        %v643 = vsel %vm619, %v635, 0.0
        %v644 = vsel %vm620, %v636, 0.0
        %v645 = vsel %vm621, %v637, 0.0
        %v646 = vsel %vm622, %v638, 0.0
        %v647 = vsel %vm623, %v639, 0.0
        %v648 = vsel %vm624, %v640, 0.0
        %v649 = vsel %vm625, %v641, 0.0
        %v650 = vsel %vm626, %v642, 0.0
        %vm651 = vcmask 7168
        %v652 = vsel %vm651, %v643, 0.0
        %v653 = vsel %vm651, %v644, 0.0
        %v654 = vadd.f32 %v652, %v653
        %v655 = vsel %vm651, %v645, 0.0
        %v656 = vadd.f32 %v654, %v655
        %v657 = vsel %vm651, %v646, 0.0
        %v658 = vadd.f32 %v656, %v657
        %v659 = vsel %vm651, %v647, 0.0
        %v660 = vadd.f32 %v658, %v659
        %v661 = vsel %vm651, %v648, 0.0
        %v662 = vadd.f32 %v660, %v661
        %v663 = vsel %vm651, %v649, 0.0
        %v664 = vadd.f32 %v662, %v663
        %v665 = vsel %vm651, %v650, 0.0
        %v666 = vadd.f32 %v664, %v665
        %667 = vadd.xlane.f32.xlu0 %v666
        %v668 = vpop.xlane.xlu0 %667
        %v669 = vrot.slane %v668, 4
        %v670 = vadd.f32 %v668, %v669
        %v671 = vrot.slane %v670, 2
        %v672 = vadd.f32 %v670, %v671
        %v673 = vrot.slane %v672, 1
        %v674 = vadd.f32 %v672, %v673
        %s675 = vtos %v674
        %v676 = vsel %vm619, %v589, 0.0
        %v677 = vsel %vm620, %v592, 0.0
        %v678 = vsel %vm621, %v595, 0.0
        %v679 = vsel %vm622, %v598, 0.0
        %v680 = vsel %vm623, %v601, 0.0
        %v681 = vsel %vm624, %v604, 0.0
        %v682 = vsel %vm625, %v607, 0.0
        %v683 = vsel %vm626, %v610, 0.0
        %v684 = vsel %vm651, %v676, 0.0
        %v685 = vsel %vm651, %v677, 0.0
        %v686 = vadd.f32 %v684, %v685
        %v687 = vsel %vm651, %v678, 0.0
        %v688 = vadd.f32 %v686, %v687
        %v689 = vsel %vm651, %v679, 0.0
        %v690 = vadd.f32 %v688, %v689
        %v691 = vsel %vm651, %v680, 0.0
        %v692 = vadd.f32 %v690, %v691
        %v693 = vsel %vm651, %v681, 0.0
        %v694 = vadd.f32 %v692, %v693
        %v695 = vsel %vm651, %v682, 0.0
        %v696 = vadd.f32 %v694, %v695
        %v697 = vsel %vm651, %v683, 0.0
        %v698 = vadd.f32 %v696, %v697
        %699 = vadd.xlane.f32.xlu0 %v698
        %v700 = vpop.xlane.xlu0 %699
        %v701 = vrot.slane %v700, 4
        %v702 = vadd.f32 %v700, %v701
        %v703 = vrot.slane %v702, 2
        %v704 = vadd.f32 %v702, %v703
        %v705 = vrot.slane %v704, 1
        %v706 = vadd.f32 %v704, %v705
        %s707 = vtos %v706
        %vm708 = vcmp.eq.s32.totalorder %v386, 0
        %v709 = vstv %s675
        %v710 = vsel %vm708, %v709, 0.0
        %v711 = vadd.f32 %v710, 0.0
        %vm712 = vcmp.eq.s32.totalorder %v386, 1
        %v713 = vstv %s707
        %v714 = vsel %vm712, %v713, 0.0
        %v715 = vadd.f32 %v711, %v714
        %v716 = vld [vmem:[%s339] sm:$0xff]
        %v717 = vld [vmem:[%s339 + $0x8] sm:$0xff]
        %v718 = vld [vmem:[%s339 + $0x10] sm:$0xff]
        %v719 = vld [vmem:[%s339 + $0x18] sm:$0xff]
        %v720 = vld [vmem:[%s339 + $0x20] sm:$0xff]
        %v721 = vld [vmem:[%s339 + $0x28] sm:$0xff]
        %v722 = vld [vmem:[%s339 + $0x30] sm:$0xff]
        %v723 = vld [vmem:[%s339 + $0x38] sm:$0xff]
        %v724 = vld [vmem:[%s4] sm:$0x1]
        %vm725 = vcmp.ge.s32.totalorder %v351, 1
        %vm726 = vcmp.ge.s32.totalorder %v352, 1
        %vm727 = vcmp.ge.s32.totalorder %v353, 1
        %vm728 = vcmp.ge.s32.totalorder %v354, 1
        %vm729 = vcmp.ge.s32.totalorder %v355, 1
        %vm730 = vcmp.ge.s32.totalorder %v356, 1
        %vm731 = vcmp.ge.s32.totalorder %v357, 1
        %vm732 = vcmp.ge.s32.totalorder %v358, 1
        %vm733 = vcmp.lt.s32.totalorder %v351, 8
        %vm734 = vcmp.lt.s32.totalorder %v352, 8
        %vm735 = vcmp.lt.s32.totalorder %v353, 8
        %vm736 = vcmp.lt.s32.totalorder %v354, 8
        %vm737 = vcmp.lt.s32.totalorder %v355, 8
        %vm738 = vcmp.lt.s32.totalorder %v356, 8
        %vm739 = vcmp.lt.s32.totalorder %v357, 8
        %vm740 = vcmp.lt.s32.totalorder %v358, 8
        %vm741 = vmand %vm725, %vm733
        %vm742 = vmand %vm726, %vm734
        %vm743 = vmand %vm727, %vm735
        %vm744 = vmand %vm728, %vm736
        %vm745 = vmand %vm729, %vm737
        %vm746 = vmand %vm730, %vm738
        %vm747 = vmand %vm731, %vm739
        %vm748 = vmand %vm732, %vm740
        %v749 = vsel %vm741, 1, 0
        %v750 = vsel %vm742, 1, 0
        %v751 = vsel %vm743, 1, 0
        %v752 = vsel %vm744, 1, 0
        %v753 = vsel %vm745, 1, 0
        %v754 = vsel %vm746, 1, 0
        %v755 = vsel %vm747, 1, 0
        %v756 = vsel %vm748, 1, 0
        %vm757 = vcmp.ge.s32.totalorder %v351, 8
        %vm758 = vcmp.ge.s32.totalorder %v352, 8
        %vm759 = vcmp.ge.s32.totalorder %v353, 8
        %vm760 = vcmp.ge.s32.totalorder %v354, 8
        %vm761 = vcmp.ge.s32.totalorder %v355, 8
        %vm762 = vcmp.ge.s32.totalorder %v356, 8
        %vm763 = vcmp.ge.s32.totalorder %v357, 8
        %vm764 = vcmp.ge.s32.totalorder %v358, 8
        %vm765 = vcmp.lt.s32.totalorder %v351, 15
        %vm766 = vcmp.lt.s32.totalorder %v352, 15
        %vm767 = vcmp.lt.s32.totalorder %v353, 15
        %vm768 = vcmp.lt.s32.totalorder %v354, 15
        %vm769 = vcmp.lt.s32.totalorder %v355, 15
        %vm770 = vcmp.lt.s32.totalorder %v356, 15
        %vm771 = vcmp.lt.s32.totalorder %v357, 15
        %vm772 = vcmp.lt.s32.totalorder %v358, 15
        %vm773 = vmand %vm757, %vm765
        %vm774 = vmand %vm758, %vm766
        %vm775 = vmand %vm759, %vm767
        %vm776 = vmand %vm760, %vm768
        %vm777 = vmand %vm761, %vm769
        %vm778 = vmand %vm762, %vm770
        %vm779 = vmand %vm763, %vm771
        %vm780 = vmand %vm764, %vm772
        %v781 = vsel %vm773, 1, 0
        %v782 = vsel %vm774, 1, 0
        %v783 = vsel %vm775, 1, 0
        %v784 = vsel %vm776, 1, 0
        %v785 = vsel %vm777, 1, 0
        %v786 = vsel %vm778, 1, 0
        %v787 = vsel %vm779, 1, 0
        %v788 = vsel %vm780, 1, 0
        %v789 = vmul.u32 %v781, 2
        %v790 = vmul.u32 %v782, 2
        %v791 = vmul.u32 %v783, 2
        %v792 = vmul.u32 %v784, 2
        %v793 = vmul.u32 %v785, 2
        %v794 = vmul.u32 %v786, 2
        %v795 = vmul.u32 %v787, 2
        %v796 = vmul.u32 %v788, 2
        %v797 = vadd.s32 %v749, %v789
        %v798 = vadd.s32 %v750, %v790
        %v799 = vadd.s32 %v751, %v791
        %v800 = vadd.s32 %v752, %v792
        %v801 = vadd.s32 %v753, %v793
        %v802 = vadd.s32 %v754, %v794
        %v803 = vadd.s32 %v755, %v795
        %v804 = vadd.s32 %v756, %v796
        %vm805 = vcmp.ge.s32.totalorder %v351, 15
        %vm806 = vcmp.ge.s32.totalorder %v352, 15
        %vm807 = vcmp.ge.s32.totalorder %v353, 15
        %vm808 = vcmp.ge.s32.totalorder %v354, 15
        %vm809 = vcmp.ge.s32.totalorder %v355, 15
        %vm810 = vcmp.ge.s32.totalorder %v356, 15
        %vm811 = vcmp.ge.s32.totalorder %v357, 15
        %vm812 = vcmp.ge.s32.totalorder %v358, 15
        %vm813 = vcmp.lt.s32.totalorder %v351, 22
        %vm814 = vcmp.lt.s32.totalorder %v352, 22
        %vm815 = vcmp.lt.s32.totalorder %v353, 22
        %vm816 = vcmp.lt.s32.totalorder %v354, 22
        %vm817 = vcmp.lt.s32.totalorder %v355, 22
        %vm818 = vcmp.lt.s32.totalorder %v356, 22
        %vm819 = vcmp.lt.s32.totalorder %v357, 22
        %vm820 = vcmp.lt.s32.totalorder %v358, 22
        %vm821 = vmand %vm805, %vm813
        %vm822 = vmand %vm806, %vm814
        %vm823 = vmand %vm807, %vm815
        %vm824 = vmand %vm808, %vm816
        %vm825 = vmand %vm809, %vm817
        %vm826 = vmand %vm810, %vm818
        %vm827 = vmand %vm811, %vm819
        %vm828 = vmand %vm812, %vm820
        %v829 = vsel %vm821, 1, 0
        %v830 = vsel %vm822, 1, 0
        %v831 = vsel %vm823, 1, 0
        %v832 = vsel %vm824, 1, 0
        %v833 = vsel %vm825, 1, 0
        %v834 = vsel %vm826, 1, 0
        %v835 = vsel %vm827, 1, 0
        %v836 = vsel %vm828, 1, 0
        %v837 = vadd.s32 %v797, %v829
        %v838 = vadd.s32 %v798, %v830
        %v839 = vadd.s32 %v799, %v831
        %v840 = vadd.s32 %v800, %v832
        %v841 = vadd.s32 %v801, %v833
        %v842 = vadd.s32 %v802, %v834
        %v843 = vadd.s32 %v803, %v835
        %v844 = vadd.s32 %v804, %v836
        %vm845 = vcmp.le.s32.totalorder %v351, 0
        %vm846 = vcmp.le.s32.totalorder %v352, 0
        %vm847 = vcmp.le.s32.totalorder %v353, 0
        %vm848 = vcmp.le.s32.totalorder %v354, 0
        %vm849 = vcmp.le.s32.totalorder %v355, 0
        %vm850 = vcmp.le.s32.totalorder %v356, 0
        %vm851 = vcmp.le.s32.totalorder %v357, 0
        %vm852 = vcmp.le.s32.totalorder %v358, 0
        %v853 = vsel %vm845, %v351, %v837
        %v854 = vsel %vm846, %v352, %v838
        %v855 = vsel %vm847, %v353, %v839
        %v856 = vsel %vm848, %v354, %v840
        %v857 = vsel %vm849, %v355, %v841
        %v858 = vsel %vm850, %v356, %v842
        %v859 = vsel %vm851, %v357, %v843
        %v860 = vsel %vm852, %v358, %v844
        %vm861 = vcmask 23552
        %v862 = vsel %vm861, %v716, -inf
        %863 = vmax.xlane.f32.xlu0 %v862
        %v864 = vpop.xlane.xlu0 %863
        %v865 = vsel %vm861, %v717, -inf
        %866 = vmax.xlane.f32.xlu0 %v865
        %v867 = vpop.xlane.xlu0 %866
        %v868 = vsel %vm861, %v718, -inf
        %869 = vmax.xlane.f32.xlu0 %v868
        %v870 = vpop.xlane.xlu0 %869
        %v871 = vsel %vm861, %v719, -inf
        %872 = vmax.xlane.f32.xlu0 %v871
        %v873 = vpop.xlane.xlu0 %872
        %v874 = vsel %vm861, %v720, -inf
        %875 = vmax.xlane.f32.xlu0 %v874
        %v876 = vpop.xlane.xlu0 %875
        %v877 = vsel %vm861, %v721, -inf
        %878 = vmax.xlane.f32.xlu0 %v877
        %v879 = vpop.xlane.xlu0 %878
        %v880 = vsel %vm861, %v722, -inf
        %881 = vmax.xlane.f32.xlu0 %v880
        %v882 = vpop.xlane.xlu0 %881
        %v883 = vsel %vm861, %v723, -inf
        %884 = vmax.xlane.f32.xlu0 %v883
        %v885 = vpop.xlane.xlu0 %884
        %v886 = vsub.f32 %v716, %v864
        %v887 = vsub.f32 %v717, %v867
        %v888 = vsub.f32 %v718, %v870
        %v889 = vsub.f32 %v719, %v873
        %v890 = vsub.f32 %v720, %v876
        %v891 = vsub.f32 %v721, %v879
        %v892 = vsub.f32 %v722, %v882
        %v893 = vsub.f32 %v723, %v885
        %v894 = vmul.f32 %v886, 1.442695
        %v895 = vpow.pop %v894
        %v896 = vmul.f32 %v887, 1.442695
        %v897 = vpow.pop %v896
        %v898 = vmul.f32 %v888, 1.442695
        %v899 = vpow.pop %v898
        %v900 = vmul.f32 %v889, 1.442695
        %v901 = vpow.pop %v900
        %v902 = vmul.f32 %v890, 1.442695
        %v903 = vpow.pop %v902
        %v904 = vmul.f32 %v891, 1.442695
        %v905 = vpow.pop %v904
        %v906 = vmul.f32 %v892, 1.442695
        %v907 = vpow.pop %v906
        %v908 = vmul.f32 %v893, 1.442695
        %v909 = vpow.pop %v908
        %v910 = vsel %vm861, %v895, 0.0
        %911 = vadd.xlane.f32.xlu0 %v910
        %v912 = vpop.xlane.xlu0 %911
        %v913 = vsel %vm861, %v897, 0.0
        %914 = vadd.xlane.f32.xlu0 %v913
        %v915 = vpop.xlane.xlu0 %914
        %v916 = vsel %vm861, %v899, 0.0
        %917 = vadd.xlane.f32.xlu0 %v916
        %v918 = vpop.xlane.xlu0 %917
        %v919 = vsel %vm861, %v901, 0.0
        %920 = vadd.xlane.f32.xlu0 %v919
        %v921 = vpop.xlane.xlu0 %920
        %v922 = vsel %vm861, %v903, 0.0
        %923 = vadd.xlane.f32.xlu0 %v922
        %v924 = vpop.xlane.xlu0 %923
        %v925 = vsel %vm861, %v905, 0.0
        %926 = vadd.xlane.f32.xlu0 %v925
        %v927 = vpop.xlane.xlu0 %926
        %v928 = vsel %vm861, %v907, 0.0
        %929 = vadd.xlane.f32.xlu0 %v928
        %v930 = vpop.xlane.xlu0 %929
        %v931 = vsel %vm861, %v909, 0.0
        %932 = vadd.xlane.f32.xlu0 %v931
        %v933 = vpop.xlane.xlu0 %932
        %v934 = vlog2.pop %v912
        %v935 = vmul.f32 %v934, 0.6931472
        %v936 = vlog2.pop %v915
        %v937 = vmul.f32 %v936, 0.6931472
        %v938 = vlog2.pop %v918
        %v939 = vmul.f32 %v938, 0.6931472
        %v940 = vlog2.pop %v921
        %v941 = vmul.f32 %v940, 0.6931472
        %v942 = vlog2.pop %v924
        %v943 = vmul.f32 %v942, 0.6931472
        %v944 = vlog2.pop %v927
        %v945 = vmul.f32 %v944, 0.6931472
        %v946 = vlog2.pop %v930
        %v947 = vmul.f32 %v946, 0.6931472
        %v948 = vlog2.pop %v933
        %v949 = vmul.f32 %v948, 0.6931472
        %v950 = vadd.f32 %v935, %v864
        %v951 = vadd.f32 %v937, %v867
        %v952 = vadd.f32 %v939, %v870
        %v953 = vadd.f32 %v941, %v873
        %v954 = vadd.f32 %v943, %v876
        %v955 = vadd.f32 %v945, %v879
        %v956 = vadd.f32 %v947, %v882
        %v957 = vadd.f32 %v949, %v885
        %958 = vset.pattern.permute.xlu0 0
        %959 = vperm.xlu0 %958, %v853
        %v960 = vpop.permute.xlu0 %959
        %961 = vset.pattern.permute.xlu0 0
        %962 = vperm.xlu0 %961, %v854
        %v963 = vpop.permute.xlu0 %962
        %964 = vset.pattern.permute.xlu0 0
        %965 = vperm.xlu0 %964, %v855
        %v966 = vpop.permute.xlu0 %965
        %967 = vset.pattern.permute.xlu0 0
        %968 = vperm.xlu0 %967, %v856
        %v969 = vpop.permute.xlu0 %968
        %970 = vset.pattern.permute.xlu0 0
        %971 = vperm.xlu0 %970, %v857
        %v972 = vpop.permute.xlu0 %971
        %973 = vset.pattern.permute.xlu0 0
        %974 = vperm.xlu0 %973, %v858
        %v975 = vpop.permute.xlu0 %974
        %976 = vset.pattern.permute.xlu0 0
        %977 = vperm.xlu0 %976, %v859
        %v978 = vpop.permute.xlu0 %977
        %979 = vset.pattern.permute.xlu0 0
        %980 = vperm.xlu0 %979, %v860
        %v981 = vpop.permute.xlu0 %980
        %vm982 = vcmp.eq.s32.totalorder %v386, %v960
        %vm983 = vcmp.eq.s32.totalorder %v386, %v963
        %vm984 = vcmp.eq.s32.totalorder %v386, %v966
        %vm985 = vcmp.eq.s32.totalorder %v386, %v969
        %vm986 = vcmp.eq.s32.totalorder %v386, %v972
        %vm987 = vcmp.eq.s32.totalorder %v386, %v975
        %vm988 = vcmp.eq.s32.totalorder %v386, %v978
        %vm989 = vcmp.eq.s32.totalorder %v386, %v981
        %v990 = vsel %vm982, 1, 0
        %v991 = vsel %vm983, 1, 0
        %v992 = vsel %vm984, 1, 0
        %v993 = vsel %vm985, 1, 0
        %v994 = vsel %vm986, 1, 0
        %v995 = vsel %vm987, 1, 0
        %v996 = vsel %vm988, 1, 0
        %v997 = vsel %vm989, 1, 0
        %v998 = vcvt.s32.f32 %v990
        %v999 = vcvt.s32.f32 %v991
        %v1000 = vcvt.s32.f32 %v992
        %v1001 = vcvt.s32.f32 %v993
        %v1002 = vcvt.s32.f32 %v994
        %v1003 = vcvt.s32.f32 %v995
        %v1004 = vcvt.s32.f32 %v996
        %v1005 = vcvt.s32.f32 %v997
        %v1006 = vmul.f32 %v998, %v716
        %v1007 = vmul.f32 %v999, %v717
        %v1008 = vmul.f32 %v1000, %v718
        %v1009 = vmul.f32 %v1001, %v719
        %v1010 = vmul.f32 %v1002, %v720
        %v1011 = vmul.f32 %v1003, %v721
        %v1012 = vmul.f32 %v1004, %v722
        %v1013 = vmul.f32 %v1005, %v723
        %v1014 = vsel %vm861, %v1006, 0.0
        %1015 = vadd.xlane.f32.xlu0 %v1014
        %v1016 = vpop.xlane.xlu0 %1015
        %v1017 = vsel %vm861, %v1007, 0.0
        %1018 = vadd.xlane.f32.xlu0 %v1017
        %v1019 = vpop.xlane.xlu0 %1018
        %v1020 = vsel %vm861, %v1008, 0.0
        %1021 = vadd.xlane.f32.xlu0 %v1020
        %v1022 = vpop.xlane.xlu0 %1021
        %v1023 = vsel %vm861, %v1009, 0.0
        %1024 = vadd.xlane.f32.xlu0 %v1023
        %v1025 = vpop.xlane.xlu0 %1024
        %v1026 = vsel %vm861, %v1010, 0.0
        %1027 = vadd.xlane.f32.xlu0 %v1026
        %v1028 = vpop.xlane.xlu0 %1027
        %v1029 = vsel %vm861, %v1011, 0.0
        %1030 = vadd.xlane.f32.xlu0 %v1029
        %v1031 = vpop.xlane.xlu0 %1030
        %v1032 = vsel %vm861, %v1012, 0.0
        %1033 = vadd.xlane.f32.xlu0 %v1032
        %v1034 = vpop.xlane.xlu0 %1033
        %v1035 = vsel %vm861, %v1013, 0.0
        %1036 = vadd.xlane.f32.xlu0 %v1035
        %v1037 = vpop.xlane.xlu0 %1036
        %v1039 = vlaneseq
        %v1040 = vshrl.u32 %v1039, 7
        %v1041 = vsub.s32 0, %v1040
        %v1042 = vrot.slane %v724, %v1041
        %v1044 = vmul.f32 %v998, %v1042
        %v1045 = vmul.f32 %v999, %v1042
        %v1046 = vmul.f32 %v1000, %v1042
        %v1047 = vmul.f32 %v1001, %v1042
        %v1048 = vmul.f32 %v1002, %v1042
        %v1049 = vmul.f32 %v1003, %v1042
        %v1050 = vmul.f32 %v1004, %v1042
        %v1051 = vmul.f32 %v1005, %v1042
        %v1052 = vsel %vm861, %v1044, 0.0
        %1053 = vadd.xlane.f32.xlu0 %v1052
        %v1054 = vpop.xlane.xlu0 %1053
        %v1055 = vsel %vm861, %v1045, 0.0
        %1056 = vadd.xlane.f32.xlu0 %v1055
        %v1057 = vpop.xlane.xlu0 %1056
        %v1058 = vsel %vm861, %v1046, 0.0
        %1059 = vadd.xlane.f32.xlu0 %v1058
        %v1060 = vpop.xlane.xlu0 %1059
        %v1061 = vsel %vm861, %v1047, 0.0
        %1062 = vadd.xlane.f32.xlu0 %v1061
        %v1063 = vpop.xlane.xlu0 %1062
        %v1064 = vsel %vm861, %v1048, 0.0
        %1065 = vadd.xlane.f32.xlu0 %v1064
        %v1066 = vpop.xlane.xlu0 %1065
        %v1067 = vsel %vm861, %v1049, 0.0
        %1068 = vadd.xlane.f32.xlu0 %v1067
        %v1069 = vpop.xlane.xlu0 %1068
        %v1070 = vsel %vm861, %v1050, 0.0
        %1071 = vadd.xlane.f32.xlu0 %v1070
        %v1072 = vpop.xlane.xlu0 %1071
        %v1073 = vsel %vm861, %v1051, 0.0
        %1074 = vadd.xlane.f32.xlu0 %v1073
        %v1075 = vpop.xlane.xlu0 %1074
        %vm1076 = vcmp.ge.s32.totalorder %v853, 0
        %vm1077 = vcmp.ge.s32.totalorder %v854, 0
        %vm1078 = vcmp.ge.s32.totalorder %v855, 0
        %vm1079 = vcmp.ge.s32.totalorder %v856, 0
        %vm1080 = vcmp.ge.s32.totalorder %v857, 0
        %vm1081 = vcmp.ge.s32.totalorder %v858, 0
        %vm1082 = vcmp.ge.s32.totalorder %v859, 0
        %vm1083 = vcmp.ge.s32.totalorder %v860, 0
        %vm1084 = vmand %vm377, %vm1076
        %vm1085 = vmand %vm378, %vm1077
        %vm1086 = vmand %vm379, %vm1078
        %vm1087 = vmand %vm380, %vm1079
        %vm1088 = vmand %vm381, %vm1080
        %vm1089 = vmand %vm382, %vm1081
        %vm1090 = vmand %vm383, %vm1082
        %vm1091 = vmand %vm384, %vm1083
        %v1092 = vsub.f32 %v950, %v1016
        %v1093 = vsub.f32 %v951, %v1019
        %v1094 = vsub.f32 %v952, %v1022
        %v1095 = vsub.f32 %v953, %v1025
        %v1096 = vsub.f32 %v954, %v1028
        %v1097 = vsub.f32 %v955, %v1031
        %v1098 = vsub.f32 %v956, %v1034
        %v1099 = vsub.f32 %v957, %v1037
        %v1100 = vmul.f32 %v1054, %v1092
        %v1101 = vmul.f32 %v1057, %v1093
        %v1102 = vmul.f32 %v1060, %v1094
        %v1103 = vmul.f32 %v1063, %v1095
        %v1104 = vmul.f32 %v1066, %v1096
        %v1105 = vmul.f32 %v1069, %v1097
        %v1106 = vmul.f32 %v1072, %v1098
        %v1107 = vmul.f32 %v1075, %v1099
        %v1108 = vsel %vm1084, %v1100, 0.0
        %v1109 = vsel %vm1085, %v1101, 0.0
        %v1110 = vsel %vm1086, %v1102, 0.0
        %v1111 = vsel %vm1087, %v1103, 0.0
        %v1112 = vsel %vm1088, %v1104, 0.0
        %v1113 = vsel %vm1089, %v1105, 0.0
        %v1114 = vsel %vm1090, %v1106, 0.0
        %v1115 = vsel %vm1091, %v1107, 0.0
        %v1116 = vsel %vm651, %v1108, 0.0
        %v1117 = vsel %vm651, %v1109, 0.0
        %v1118 = vadd.f32 %v1116, %v1117
        %v1119 = vsel %vm651, %v1110, 0.0
        %v1120 = vadd.f32 %v1118, %v1119
        %v1121 = vsel %vm651, %v1111, 0.0
        %v1122 = vadd.f32 %v1120, %v1121
        %v1123 = vsel %vm651, %v1112, 0.0
        %v1124 = vadd.f32 %v1122, %v1123
        %v1125 = vsel %vm651, %v1113, 0.0
        %v1126 = vadd.f32 %v1124, %v1125
        %v1127 = vsel %vm651, %v1114, 0.0
        %v1128 = vadd.f32 %v1126, %v1127
        %v1129 = vsel %vm651, %v1115, 0.0
        %v1130 = vadd.f32 %v1128, %v1129
        %1131 = vadd.xlane.f32.xlu0 %v1130
        %v1132 = vpop.xlane.xlu0 %1131
        %v1133 = vrot.slane %v1132, 4
        %v1134 = vadd.f32 %v1132, %v1133
        %v1135 = vrot.slane %v1134, 2
        %v1136 = vadd.f32 %v1134, %v1135
        %v1137 = vrot.slane %v1136, 1
        %v1138 = vadd.f32 %v1136, %v1137
        %s1139 = vtos %v1138
        %v1140 = vsel %vm1084, %v1054, 0.0
        %v1141 = vsel %vm1085, %v1057, 0.0
        %v1142 = vsel %vm1086, %v1060, 0.0
        %v1143 = vsel %vm1087, %v1063, 0.0
        %v1144 = vsel %vm1088, %v1066, 0.0
        %v1145 = vsel %vm1089, %v1069, 0.0
        %v1146 = vsel %vm1090, %v1072, 0.0
        %v1147 = vsel %vm1091, %v1075, 0.0
        %v1148 = vsel %vm651, %v1140, 0.0
        %v1149 = vsel %vm651, %v1141, 0.0
        %v1150 = vadd.f32 %v1148, %v1149
        %v1151 = vsel %vm651, %v1142, 0.0
        %v1152 = vadd.f32 %v1150, %v1151
        %v1153 = vsel %vm651, %v1143, 0.0
        %v1154 = vadd.f32 %v1152, %v1153
        %v1155 = vsel %vm651, %v1144, 0.0
        %v1156 = vadd.f32 %v1154, %v1155
        %v1157 = vsel %vm651, %v1145, 0.0
        %v1158 = vadd.f32 %v1156, %v1157
        %v1159 = vsel %vm651, %v1146, 0.0
        %v1160 = vadd.f32 %v1158, %v1159
        %v1161 = vsel %vm651, %v1147, 0.0
        %v1162 = vadd.f32 %v1160, %v1161
        %1163 = vadd.xlane.f32.xlu0 %v1162
        %v1164 = vpop.xlane.xlu0 %1163
        %v1165 = vrot.slane %v1164, 4
        %v1166 = vadd.f32 %v1164, %v1165
        %v1167 = vrot.slane %v1166, 2
        %v1168 = vadd.f32 %v1166, %v1167
        %v1169 = vrot.slane %v1168, 1
        %v1170 = vadd.f32 %v1168, %v1169
        %s1171 = vtos %v1170
        %vm1172 = vcmp.eq.s32.totalorder %v386, 2
        %v1173 = vstv %s1139
        %v1174 = vsel %vm1172, %v1173, 0.0
        %v1175 = vadd.f32 %v715, %v1174
        %vm1176 = vcmp.eq.s32.totalorder %v386, 3
        %v1177 = vstv %s1171
        %v1178 = vsel %vm1176, %v1177, 0.0
        %v1179 = vadd.f32 %v1175, %v1178
        %v1180 = vld [vmem:[%s307] sm:$0xff]
        %v1181 = vadd.f32 %v1180, %v1179
        %1182 = vst [vmem:[%s307] sm:$0xff] %v1181
        %s1183 = sand.u32 %s177, 1
        %s1184 = scalar_lea.sflag [#allocation3], %s1183
        %s1185 = sand.u32 %s177, 1
        %s1186 = smul.addr %s1185, 8
        %s1187 = scalar_lea.vmem [#allocation2], %s1186
        // Predicated region
        $region45: #{tpu_custom_call.1} parent=39 // pred_check
          %p1188 = pneg %p187
        $region46: #{tpu_custom_call.1} parent=39 // pred_check_branch
          %1190 = sbr.rel (%p1188) target = $region48
        $region47: #{tpu_custom_call.1} parent=39 // pred_region
          %s1192 = ssub.s32 128, 128
          %1193 = vsyncadd %s1184, %s1192
          %s1194 = smul.addr %s23, 128
          %s1195 = scalar_lea.hbm %s5, %s1194
          %s1197 = sshll.u32 %s1187, 4
          %s1198 = int_to_ptr.vmem [resolvable:$true] %s1197
          %1200 = dma.vmem_to_hbm [thread:$0]  %s1198, 128, %s1195, %s1184
        $region48: #{tpu_custom_call.1} parent=39 // pred_fallthru
          _
      $region40: #{tpu_custom_call.1} parent=5 // pred_fallthru
        _
      %p1201 = scmp.le.s32.totalorder 2, %s14
      // Predicated region
      $region49: #{tpu_custom_call.1} parent=5 // pred_check
        %p1202 = pneg %p1201
      $region50: #{tpu_custom_call.1} parent=5 // pred_check_branch
        %1204 = sbr.rel (%p1202) target = $region52
      $region51: #{tpu_custom_call.1} parent=5 // pred_region
        %s1205 = ssub.s32 %s14, 2
        // Predicated region
        $region53: #{tpu_custom_call.1} parent=51 // pred_check
          %p1206 = pneg %p193
        $region54: #{tpu_custom_call.1} parent=51 // pred_check_branch
          %1208 = sbr.rel (%p1206) target = $region56
        $region55: #{tpu_custom_call.1} parent=51 // pred_region
          %s1209 = sand.u32 %s178, 1
          %s1210 = scalar_lea.sflag [#allocation3], %s1209
          %s1211 = sand.u32 %s178, 1
          %s1212 = smul.addr %s1211, 8
          %s1213 = scalar_lea.vmem [#allocation2], %s1212
          %1214 = dma.done %s1210, 128
        $region56: #{tpu_custom_call.1} parent=51 // pred_fallthru
          _
      $region52: #{tpu_custom_call.1} parent=5 // pred_fallthru
        _
    $region6: #{tpu_custom_call.1} parent=1 // loop_footer
      %s18 = sadd.s32 1, %s14
    $region7: #{tpu_custom_call.1} parent=1 // loop_footer_branch
      %13 = sbr.rel target = $region3
    $region8: #{tpu_custom_call.1} parent=1 // loop_exit
      _
    %1215 = vsyncpa [#allocation3], 1
    %s1216 = scalar_lea.sflag [#allocation3], 1
    %1217 = vsyncpa %s1216, 1

</llo_original>
